<compile_context>
chip_gen: v7x
topology: tpu7x:2x2x1
jax: 0.10.0
libtpu: 0.0.40
codegen_flags: <defaults>
</compile_context>

<pallas_src>
import functools

import jax
import jax.numpy as jnp
from jax import lax
from jax.experimental import pallas as pl
from jax.experimental.pallas import tpu as pltpu


# --------------------------------- kernel ------------------------------------
def basic_block_kernel(x_ref, w1_ref, b1_ref, w2_ref, b2_ref, o_ref, *, h):
    """Whole BasicBlock forward for a slab of B_TILE images.

    x_ref  : (M, L)    activation slab, M = B_TILE*H rows, L = W*C lanes
                       (bf16 on the perf path, f32 on the validation path)
    w1_ref : (L, 3*L)  fused banded conv1 weights (BN1 scale folded); the 3 dh
                       taps are concatenated along the output dim
    b1_ref : (1, L)    BN1 bias, tiled along W
    w2_ref : (L, 3*L)  fused banded conv2 weights (BN2 scale folded)
    b2_ref : (1, L)    BN2 bias, tiled along W
    o_ref  : (M, L)    f32 output slab
    """
    M, L = o_ref.shape

    # Image-boundary masks, built ONCE and reused by both convs (JAX does not
    # CSE broadcast_in_dim/iota, so do not rebuild them inside banded_conv).
    row_in_img = lax.broadcasted_iota(jnp.int32, (M, L), 0) % h
    not_top = row_in_img != 0         # rows allowed to take the dh=0 tap
    not_bot = row_in_img != h - 1     # rows allowed to take the dh=2 tap

    def banded_conv(op, w_ref):
        # One fused (M,L) x (L,3L) MXU matmul covers all 3 dh taps; the dw taps
        # and the zero padding along W are folded into the banded weight blocks
        # on the host.  f32 accumulation via preferred_element_type.
        y = jnp.dot(op, w_ref[...], preferred_element_type=jnp.float32)
        y0 = y[:, :L]            # dh = 0 tap: out[r] += y0[r - 1]
        y1 = y[:, L:2 * L]       # dh = 1 tap: out[r] += y1[r]
        y2 = y[:, 2 * L:]        # dh = 2 tap: out[r] += y2[r + 1]
        # Sublane rolls go to the XLU (free slot while the MXU is busy); masks
        # zero contributions that would leak across image boundaries inside the
        # batched slab (this also implements the conv's zero padding in H).
        down = jnp.where(not_top, pltpu.roll(y0, shift=1, axis=0), 0.0)
        up = jnp.where(not_bot, pltpu.roll(y2, shift=M - 1, axis=0), 0.0)
        return y1 + down + up

    x = x_ref[...]                                        # (M, L)
    mid = banded_conv(x, w1_ref)                          # conv1 (+ BN1 scale)
    mid = jnp.maximum(mid + b1_ref[...], 0.0)             # BN1 bias + ReLU (f32)
    out = banded_conv(mid.astype(w2_ref.dtype), w2_ref)   # conv2 (+ BN2 scale)
    out = out + b2_ref[...] + x.astype(jnp.float32)       # BN2 bias + residual
    o_ref[...] = jnp.maximum(out, 0.0)                    # final ReLU


# ------------------------------ weight prep -----------------------------------
def _fused_banded_weights(w_hwio, W):
    """Fold a 3x3 conv (stride 1, pad 1) into one fused banded matrix.

    w_hwio: (3, 3, Cin, Cout), any per-output-channel scale already folded in.
    Returns (W*Cin, 3*W*Cout) f32: for each dh tap a block-banded matrix
        B[dh][(w_in, ci), (w_out, co)] = w[dh, w_in - w_out + 1, ci, co]
    (zero outside the band -> zero padding along W is built in), with the three
    dh blocks concatenated along the output dim so one MXU matmul covers them.
    """
    mats = []
    for dh in range(3):
        B = None
        for dw in range(3):
            band = jnp.kron(jnp.eye(W, k=1 - dw, dtype=jnp.float32),
                            w_hwio[dh, dw].astype(jnp.float32))
            B = band if B is None else B + band
        mats.append(B)
    return jnp.concatenate(mats, axis=1)


def prepare_basic_block_params(w1, s1, b1, w2, s2, b2, W,
                               matmul_dtype=jnp.bfloat16):
    """One-time host-side prep: fold BN scales, build fused banded weights.

    w*: (3,3,Cin,Cout) HWIO conv weights; s*/b*: (Cout,) folded BN scale/bias.
    Call once and reuse the returned params for every forward call.
    """
    Cout = w1.shape[-1]
    L = W * Cout
    W1 = _fused_banded_weights(w1 * s1.reshape(1, 1, 1, -1), W).astype(matmul_dtype)
    W2 = _fused_banded_weights(w2 * s2.reshape(1, 1, 1, -1), W).astype(matmul_dtype)
    bias1 = jnp.tile(b1.reshape(-1), W).reshape(1, L).astype(jnp.float32)
    bias2 = jnp.tile(b2.reshape(-1), W).reshape(1, L).astype(jnp.float32)
    return {"W1": W1, "bias1": bias1, "W2": W2, "bias2": bias2}


# --------------------------------- wrapper ------------------------------------
def basic_block_apply(x_nchw, params, *, b_tile=8):
    """x_nchw: (N, C, H, W) f32.  Returns (N, C, H, W) f32."""
    N, C, H, W = x_nchw.shape
    L = W * C
    W1 = params["W1"]
    assert W1.shape == (L, 3 * L), "identity residual requires inplanes == planes"
    act_dtype = W1.dtype  # DMA activations in the matmul dtype (bf16 perf path)

    # Pad batch to a multiple of b_tile so the grid tiles evenly.
    n_pad = (-N) % b_tile
    if n_pad:
        x_nchw = jnp.pad(x_nchw, ((0, n_pad), (0, 0), (0, 0), (0, 0)))
    Np = N + n_pad
    grid = Np // b_tile
    M = b_tile * H                     # rows per grid step (128 in the demo)

    # NCHW -> lane-dense (Np*H, W*C): channels minor, 128-wide lane vectors.
    x_rows = jnp.transpose(x_nchw, (0, 2, 3, 1)).reshape(Np * H, L).astype(act_dtype)

    kernel = functools.partial(basic_block_kernel, h=H)
    out_rows = pl.pallas_call(
        kernel,
        out_shape=jax.ShapeDtypeStruct((Np * H, L), jnp.float32),
        grid=(grid,),
        in_specs=[
            pl.BlockSpec((M, L), lambda n: (n, 0)),         # batched act slab
            pl.BlockSpec((L, 3 * L), lambda n: (0, 0)),     # resident fused W1
            pl.BlockSpec((1, L), lambda n: (0, 0)),         # resident bias1
            pl.BlockSpec((L, 3 * L), lambda n: (0, 0)),     # resident fused W2
            pl.BlockSpec((1, L), lambda n: (0, 0)),         # resident bias2
        ],
        out_specs=pl.BlockSpec((M, L), lambda n: (n, 0)),
        compiler_params=pltpu.CompilerParams(
            dimension_semantics=("parallel",)),             # megacore on v7x
    )(x_rows, W1, params["bias1"], params["W2"], params["bias2"])

    out = jnp.transpose(out_rows.reshape(Np, H, W, C), (0, 3, 1, 2))
    return out[:N]


basic_block_apply_jit = jax.jit(basic_block_apply, static_argnames=("b_tile",))


# ------------------------- reference (plain JAX) ------------------------------
def _conv3x3_ref(x_nhwc, w_hwio):
    return lax.conv_general_dilated(
        x_nhwc, w_hwio, window_strides=(1, 1), padding=((1, 1), (1, 1)),
        dimension_numbers=("NHWC", "HWIO", "NHWC"),
        precision=lax.Precision.HIGHEST)


def _ref_forward(x_nchw, w1, s1, b1, w2, s2, b2):
    x = jnp.transpose(x_nchw, (0, 2, 3, 1))
    out = jnp.maximum(_conv3x3_ref(x, w1) * s1 + b1, 0.0)
    out = _conv3x3_ref(out, w2) * s2 + b2
    out = jnp.maximum(out + x, 0.0)
    return jnp.transpose(out, (0, 3, 1, 2))


# ----------------------------------- main -------------------------------------
if __name__ == "__main__":
    # W*C = 128 -> exactly one lane-wide slab; B_TILE=8 -> M = 128 MXU rows per
    # step; N=16 -> grid of 2 steps so both v7x TensorCores are fed.
    N, C, H, W = 16, 8, 16, 16
    planes = C
    B_TILE = 8
    eps = 1e-5

    key = jax.random.PRNGKey(0)
    keys = jax.random.split(key, 11)

    x = jax.random.normal(keys[0], (N, C, H, W), dtype=jnp.float32)

    # conv weights (HWIO), deterministic init
    w1 = jax.random.normal(keys[1], (3, 3, C, planes), dtype=jnp.float32) * 0.1
    w2 = jax.random.normal(keys[2], (3, 3, planes, planes), dtype=jnp.float32) * 0.1

    # BatchNorm params / running stats, folded to per-channel scale & bias
    def make_bn(kg, kb, km, kv):
        gamma = 1.0 + 0.1 * jax.random.normal(kg, (planes,), dtype=jnp.float32)
        beta = 0.1 * jax.random.normal(kb, (planes,), dtype=jnp.float32)
        mean = 0.1 * jax.random.normal(km, (planes,), dtype=jnp.float32)
        var = jnp.abs(jax.random.normal(kv, (planes,), dtype=jnp.float32)) + 0.5
        scale = gamma / jnp.sqrt(var + eps)
        bias = beta - mean * scale
        return scale, bias

    s1, b1 = make_bn(keys[3], keys[4], keys[5], keys[6])
    s2, b2 = make_bn(keys[7], keys[8], keys[9], keys[10])

    # One-time weight prep (cached outside the steady-state forward path).
    params_bf16 = prepare_basic_block_params(w1, s1, b1, w2, s2, b2, W,
                                             matmul_dtype=jnp.bfloat16)
    params_f32 = prepare_basic_block_params(w1, s1, b1, w2, s2, b2, W,
                                            matmul_dtype=jnp.float32)

    # Performance path: bf16 activation DMA + bf16 MXU operands, f32 epilogue.
    out_bf16 = jax.block_until_ready(
        basic_block_apply_jit(x, params_bf16, b_tile=B_TILE))
    # Validation path: f32 end to end (tight numerics).
    out_f32 = jax.block_until_ready(
        basic_block_apply_jit(x, params_f32, b_tile=B_TILE))

    ref = jax.block_until_ready(_ref_forward(x, w1, s1, b1, w2, s2, b2))

    assert out_bf16.shape == (N, C, H, W)
    assert out_f32.shape == (N, C, H, W)

    err_f32 = float(jnp.max(jnp.abs(out_f32 - ref)))
    assert jnp.allclose(out_f32, ref, rtol=2e-2, atol=2e-2), \
        f"f32 path max abs err {err_f32}"

    # bf16 path: input slab, weights and residual are bf16-rounded -> loose tol.
    err_bf16 = float(jnp.max(jnp.abs(out_bf16 - ref)))
    assert jnp.allclose(out_bf16, ref, rtol=8e-2, atol=8e-2), \
        f"bf16 path max abs err {err_bf16}"

    print("KERNEL_OK")
</pallas_src>

<mosaic_0001>
module attributes {stable_mosaic.version = 11 : i64} {
  func.func @basic_block_kernel(%arg0: i32, %arg1: memref<128x128xbf16, #tpu.memory_space<vmem>>, %arg2: memref<128x384xbf16, #tpu.memory_space<vmem>>, %arg3: memref<1x128xf32, #tpu.memory_space<vmem>>, %arg4: memref<128x384xbf16, #tpu.memory_space<vmem>>, %arg5: memref<1x128xf32, #tpu.memory_space<vmem>>, %arg6: memref<128x128xf32, #tpu.memory_space<vmem>>) attributes {dimension_semantics = [#tpu.dimension_semantics<parallel>], iteration_bounds = array<i64: 2>, scalar_prefetch = 0 : i64, scratch_operands = 0 : i64, tpu.core_type = #tpu.core_type<tc>, window_params = [{transform_indices = @transform_0, window_bounds = array<i64: 128, 128>}, {pipeline_mode = #tpu.pipeline_mode<synchronous>, transform_indices = @transform_1, window_bounds = array<i64: 128, 384>}, {pipeline_mode = #tpu.pipeline_mode<synchronous>, transform_indices = @transform_2, window_bounds = array<i64: 1, 128>}, {pipeline_mode = #tpu.pipeline_mode<synchronous>, transform_indices = @transform_3, window_bounds = array<i64: 128, 384>}, {pipeline_mode = #tpu.pipeline_mode<synchronous>, transform_indices = @transform_4, window_bounds = array<i64: 1, 128>}, {transform_indices = @transform_5, window_bounds = array<i64: 128, 128>}]} {
    %0 = tpu.iota {dimensions = array<i32: 0>} : vector<128x128xi32>
    %c16_i32 = arith.constant 16 : i32
    %c0_i32 = arith.constant 0 : i32
    %1 = arith.cmpi eq, %c16_i32, %c0_i32 : i32
    %c1_i32 = arith.constant 1 : i32
    %2 = arith.select %1, %c1_i32, %c16_i32 : i32
    %3 = vector.broadcast %2 : i32 to vector<128x128xi32>
    %4 = arith.remsi %0, %3 : vector<128x128xi32>
    %c0_i32_0 = arith.constant 0 : i32
    %5 = vector.broadcast %c0_i32_0 : i32 to vector<128x128xi32>
    %6 = arith.cmpi ne, %4, %5 : vector<128x128xi32>
    %c0_i32_1 = arith.constant 0 : i32
    %7 = vector.broadcast %c0_i32_1 : i32 to vector<128x128xi32>
    %8 = arith.cmpi slt, %4, %7 : vector<128x128xi32>
    %c0_i32_2 = arith.constant 0 : i32
    %9 = arith.cmpi slt, %2, %c0_i32_2 : i32
    %10 = vector.broadcast %9 : i1 to vector<128x128xi1>
    %11 = vector.broadcast %10 : vector<128x128xi1> to vector<128x128xi1>
    %12 = arith.xori %8, %11 : vector<128x128xi1>
    %13 = arith.andi %12, %6 : vector<128x128xi1>
    %14 = vector.broadcast %2 : i32 to vector<128x128xi32>
    %15 = arith.addi %4, %14 : vector<128x128xi32>
    %16 = arith.select %13, %15, %4 : vector<128x128xi1>, vector<128x128xi32>
    %c0_i32_3 = arith.constant 0 : i32
    %17 = vector.broadcast %c0_i32_3 : i32 to vector<128x128xi32>
    %18 = arith.cmpi ne, %16, %17 : vector<128x128xi32>
    %c15_i32 = arith.constant 15 : i32
    %19 = vector.broadcast %c15_i32 : i32 to vector<128x128xi32>
    %20 = arith.cmpi ne, %16, %19 : vector<128x128xi32>
    %c0 = arith.constant 0 : index
    %c0_4 = arith.constant 0 : index
    %21 = vector.load %arg1[%c0, %c0_4] : memref<128x128xbf16, #tpu.memory_space<vmem>>, vector<128x128xbf16>
    %c0_5 = arith.constant 0 : index
    %c0_6 = arith.constant 0 : index
    %22 = vector.load %arg2[%c0_5, %c0_6] : memref<128x384xbf16, #tpu.memory_space<vmem>>, vector<128x384xbf16>
    %cst = arith.constant dense<0.000000e+00> : vector<128x384xf32>
    %23 = tpu.matmul %21, %22, %cst {dimension_numbers = #tpu.dot_dimension_numbers<[1], [0], [0], [1], [0, 0, 1, 1], [], []>} : vector<128x128xbf16>, vector<128x384xbf16>, vector<128x384xf32> -> vector<128x384xf32>
    %24 = vector.extract_strided_slice %23 {offsets = [0, 0], sizes = [128, 128], strides = [1, 1]} : vector<128x384xf32> to vector<128x128xf32>
    %25 = vector.extract_strided_slice %23 {offsets = [0, 128], sizes = [128, 128], strides = [1, 1]} : vector<128x384xf32> to vector<128x128xf32>
    %26 = vector.extract_strided_slice %23 {offsets = [0, 256], sizes = [128, 128], strides = [1, 1]} : vector<128x384xf32> to vector<128x128xf32>
    %c1_i32_7 = arith.constant 1 : i32
    %27 = tpu.dynamic_rotate %24 by %c1_i32_7 dim 0 : vector<128x128xf32>, i32 -> vector<128x128xf32>
    %cst_8 = arith.constant 0.000000e+00 : f32
    %28 = vector.broadcast %cst_8 : f32 to vector<128x128xf32>
    %29 = arith.select %18, %27, %28 : vector<128x128xi1>, vector<128x128xf32>
    %c127_i32 = arith.constant 127 : i32
    %30 = tpu.dynamic_rotate %26 by %c127_i32 dim 0 : vector<128x128xf32>, i32 -> vector<128x128xf32>
    %cst_9 = arith.constant 0.000000e+00 : f32
    %31 = vector.broadcast %cst_9 : f32 to vector<128x128xf32>
    %32 = arith.select %20, %30, %31 : vector<128x128xi1>, vector<128x128xf32>
    %33 = arith.addf %25, %29 : vector<128x128xf32>
    %34 = arith.addf %33, %32 : vector<128x128xf32>
    %c0_10 = arith.constant 0 : index
    %c0_11 = arith.constant 0 : index
    %35 = vector.load %arg3[%c0_10, %c0_11] : memref<1x128xf32, #tpu.memory_space<vmem>>, vector<1x128xf32>
    %36 = vector.broadcast %35 : vector<1x128xf32> to vector<128x128xf32>
    %37 = arith.addf %34, %36 : vector<128x128xf32>
    %cst_12 = arith.constant 0.000000e+00 : f32
    %38 = vector.broadcast %cst_12 : f32 to vector<128x128xf32>
    %39 = arith.maximumf %37, %38 : vector<128x128xf32>
    %40 = arith.truncf %39 : vector<128x128xf32> to vector<128x128xbf16>
    %c0_13 = arith.constant 0 : index
    %c0_14 = arith.constant 0 : index
    %41 = vector.load %arg4[%c0_13, %c0_14] : memref<128x384xbf16, #tpu.memory_space<vmem>>, vector<128x384xbf16>
    %cst_15 = arith.constant dense<0.000000e+00> : vector<128x384xf32>
    %42 = tpu.matmul %40, %41, %cst_15 {dimension_numbers = #tpu.dot_dimension_numbers<[1], [0], [0], [1], [0, 0, 1, 1], [], []>} : vector<128x128xbf16>, vector<128x384xbf16>, vector<128x384xf32> -> vector<128x384xf32>
    %43 = vector.extract_strided_slice %42 {offsets = [0, 0], sizes = [128, 128], strides = [1, 1]} : vector<128x384xf32> to vector<128x128xf32>
    %44 = vector.extract_strided_slice %42 {offsets = [0, 128], sizes = [128, 128], strides = [1, 1]} : vector<128x384xf32> to vector<128x128xf32>
    %45 = vector.extract_strided_slice %42 {offsets = [0, 256], sizes = [128, 128], strides = [1, 1]} : vector<128x384xf32> to vector<128x128xf32>
    %c1_i32_16 = arith.constant 1 : i32
    %46 = tpu.dynamic_rotate %43 by %c1_i32_16 dim 0 : vector<128x128xf32>, i32 -> vector<128x128xf32>
    %cst_17 = arith.constant 0.000000e+00 : f32
    %47 = vector.broadcast %cst_17 : f32 to vector<128x128xf32>
    %48 = arith.select %18, %46, %47 : vector<128x128xi1>, vector<128x128xf32>
    %c127_i32_18 = arith.constant 127 : i32
    %49 = tpu.dynamic_rotate %45 by %c127_i32_18 dim 0 : vector<128x128xf32>, i32 -> vector<128x128xf32>
    %cst_19 = arith.constant 0.000000e+00 : f32
    %50 = vector.broadcast %cst_19 : f32 to vector<128x128xf32>
    %51 = arith.select %20, %49, %50 : vector<128x128xi1>, vector<128x128xf32>
    %52 = arith.addf %44, %48 : vector<128x128xf32>
    %53 = arith.addf %52, %51 : vector<128x128xf32>
    %c0_20 = arith.constant 0 : index
    %c0_21 = arith.constant 0 : index
    %54 = vector.load %arg5[%c0_20, %c0_21] : memref<1x128xf32, #tpu.memory_space<vmem>>, vector<1x128xf32>
    %55 = vector.broadcast %54 : vector<1x128xf32> to vector<128x128xf32>
    %56 = arith.addf %53, %55 : vector<128x128xf32>
    %57 = arith.extf %21 : vector<128x128xbf16> to vector<128x128xf32>
    %58 = arith.addf %56, %57 : vector<128x128xf32>
    %cst_22 = arith.constant 0.000000e+00 : f32
    %59 = vector.broadcast %cst_22 : f32 to vector<128x128xf32>
    %60 = arith.maximumf %58, %59 : vector<128x128xf32>
    %c0_23 = arith.constant 0 : index
    %c0_24 = arith.constant 0 : index
    %61 = vector.load %arg6[%c0_23, %c0_24] : memref<128x128xf32, #tpu.memory_space<vmem>>, vector<128x128xf32>
    tpu.vector_store %arg6[%c0_23, %c0_24], %60 {strides = array<i32>} : memref<128x128xf32, #tpu.memory_space<vmem>>, vector<128x128xf32>,
    return
  }
  func.func @transform_0(%arg0: i32) -> (i32, i32) {
    %c0_i32 = arith.constant 0 : i32
    %c0_i32_0 = arith.constant 0 : i32
    return %arg0, %c0_i32 : i32, i32
  }
  func.func @transform_1(%arg0: i32) -> (i32, i32) {
    %c0_i32 = arith.constant 0 : i32
    %c0_i32_0 = arith.constant 0 : i32
    %c0_i32_1 = arith.constant 0 : i32
    return %c0_i32, %c0_i32_0 : i32, i32
  }
  func.func @transform_2(%arg0: i32) -> (i32, i32) {
    %c0_i32 = arith.constant 0 : i32
    %c0_i32_0 = arith.constant 0 : i32
    %c0_i32_1 = arith.constant 0 : i32
    return %c0_i32, %c0_i32_0 : i32, i32
  }
  func.func @transform_3(%arg0: i32) -> (i32, i32) {
    %c0_i32 = arith.constant 0 : i32
    %c0_i32_0 = arith.constant 0 : i32
    %c0_i32_1 = arith.constant 0 : i32
    return %c0_i32, %c0_i32_0 : i32, i32
  }
  func.func @transform_4(%arg0: i32) -> (i32, i32) {
    %c0_i32 = arith.constant 0 : i32
    %c0_i32_0 = arith.constant 0 : i32
    %c0_i32_1 = arith.constant 0 : i32
    return %c0_i32, %c0_i32_0 : i32, i32
  }
  func.func @transform_5(%arg0: i32) -> (i32, i32) {
    %c0_i32 = arith.constant 0 : i32
    %c0_i32_0 = arith.constant 0 : i32
    return %arg0, %c0_i32 : i32, i32
  }
}

</mosaic_0001>

<llo_original>
// kernel: basic_block_apply.1
$region0: #{basic_block_apply.1}
  #allocation0 [shape = 'u32[]', space=smem, size = 0x4, offset = 0x4, fixed_abs, tag = 'smem constant byte address 0x4 - core index']
  #allocation1 [shape = 'u32[144,128]{1,0:T(1,128)}', space=vmem, size = 0x12000, scoped, tag = 'internal scratch']
  %s0 = inlined_call_operand.vmem [shape: bf16[256,128], index: 0, kind: input, shape index: {}]
  %s1 = inlined_call_operand.vmem [shape: bf16[128,384], index: 1, kind: input, shape index: {}]
  %s2 = inlined_call_operand.vmem [shape: f32[1,128], index: 2, kind: input, shape index: {}]
  %s3 = inlined_call_operand.vmem [shape: bf16[128,384], index: 3, kind: input, shape index: {}]
  %s4 = inlined_call_operand.vmem [shape: f32[1,128], index: 4, kind: input, shape index: {}]
  %s5 = inlined_call_operand.vmem [shape: f32[256,128], index: 5, kind: output, shape index: {}]
  %s6 = sld [smem:[#allocation0]]
  $region53: #{basic_block_apply.1} parent=0
    _
  %s8 = ssub.s32 1, %s6
  %s9 = scalar_select 0, %s8, %s6
  loop: start=0, step=1, limit=4
  $region2: #{basic_block_apply.1} parent=0 // loop_pre_header
    _
  $region3: #{basic_block_apply.1} parent=0 // loop_header
    %s11 = sphi 0, %s15
    %p12 = scmp.ge.s32.totalorder %s11, 4
    %s21 = sphi 0, %s23
    %s24 = sphi 0, %s21
    %s25 = sphi 0, %s24
    %s41 = sphi 0, %s25
    %s45 = sphi 0, %s45
    %s47 = sphi 0, %s45
    %s48 = sphi 0, %s47
    %s62 = sphi 0, %s48
    %s66 = sphi 0, %s66
    %s68 = sphi 0, %s66
    %s69 = sphi 0, %s68
    %s83 = sphi 0, %s69
    %s87 = sphi 0, %s87
    %s89 = sphi 0, %s87
    %s90 = sphi 0, %s89
    %s104 = sphi 0, %s90
    %s108 = sphi 0, %s108
    %s110 = sphi 0, %s108
    %s111 = sphi 0, %s110
    %s125 = sphi 0, %s111
    %s131 = sphi 0, %s133
    %s134 = sphi 0, %s131
    %s135 = sphi 0, %s134
    %s151 = sphi 0, %s135
  $region4: #{basic_block_apply.1} parent=0 // loop_header_branch
    %14 = sbr.rel (%p12) target = $region8
  $region5: #{basic_block_apply.1} parent=0 // loop_body
    %s16 = ssub.s32 %s11, 1
    %s17 = ssub.s32 %s11, 2
    %s18 = sadd.s32 %s11, 1
    %s19 = ssub.s32 %s11, %s18
    %p20 = scmp.eq.s32.totalorder %s19, 0
    %s22 = sadd.s32 %s21, 1
    %s23 = scalar_select %p20, %s21, %s22
    %p26 = pneg %p20
    %p27 = scmp.eq.s32.totalorder %s11, 1
    %p28 = por %p26, %p27
    %p29 = scmp.ne.s32.totalorder %s21, %s24
    %p30 = scmp.eq.s32.totalorder %s11, 0
    %p31 = por %p29, %p30
    %p32 = scmp.ne.s32.totalorder %s21, %s24
    %p33 = scmp.eq.s32.totalorder %s16, 1
    %p34 = por %p32, %p33
    %p35 = scmp.ne.s32.totalorder %s24, %s25
    %p36 = scmp.eq.s32.totalorder %s16, 0
    %p37 = por %p35, %p36
    %p38 = scmp.ne.s32.totalorder %s24, %s25
    %p39 = scmp.eq.s32.totalorder %s17, 1
    %p40 = por %p38, %p39
    %p42 = scmp.ne.s32.totalorder %s25, %s41
    %p43 = scmp.eq.s32.totalorder %s17, 0
    %p44 = por %p42, %p43
    %s46 = sadd.s32 %s45, 1
    %p49 = scmp.eq.s32.totalorder %s11, 1
    %p50 = scmp.ne.s32.totalorder %s45, %s47
    %p51 = scmp.eq.s32.totalorder %s11, 0
    %p52 = por %p50, %p51
    %p53 = scmp.ne.s32.totalorder %s45, %s47
    %p54 = scmp.eq.s32.totalorder %s16, 1
    %p55 = por %p53, %p54
    %p56 = scmp.ne.s32.totalorder %s47, %s48
    %p57 = scmp.eq.s32.totalorder %s16, 0
    %p58 = por %p56, %p57
    %p59 = scmp.ne.s32.totalorder %s47, %s48
    %p60 = scmp.eq.s32.totalorder %s17, 1
    %p61 = por %p59, %p60
    %p63 = scmp.ne.s32.totalorder %s48, %s62
    %p64 = scmp.eq.s32.totalorder %s17, 0
    %p65 = por %p63, %p64
    %s67 = sadd.s32 %s66, 1
    %p70 = scmp.eq.s32.totalorder %s11, 1
    %p71 = scmp.ne.s32.totalorder %s66, %s68
    %p72 = scmp.eq.s32.totalorder %s11, 0
    %p73 = por %p71, %p72
    %p74 = scmp.ne.s32.totalorder %s66, %s68
    %p75 = scmp.eq.s32.totalorder %s16, 1
    %p76 = por %p74, %p75
    %p77 = scmp.ne.s32.totalorder %s68, %s69
    %p78 = scmp.eq.s32.totalorder %s16, 0
    %p79 = por %p77, %p78
    %p80 = scmp.ne.s32.totalorder %s68, %s69
    %p81 = scmp.eq.s32.totalorder %s17, 1
    %p82 = por %p80, %p81
    %p84 = scmp.ne.s32.totalorder %s69, %s83
    %p85 = scmp.eq.s32.totalorder %s17, 0
    %p86 = por %p84, %p85
    %s88 = sadd.s32 %s87, 1
    %p91 = scmp.eq.s32.totalorder %s11, 1
    %p92 = scmp.ne.s32.totalorder %s87, %s89
    %p93 = scmp.eq.s32.totalorder %s11, 0
    %p94 = por %p92, %p93
    %p95 = scmp.ne.s32.totalorder %s87, %s89
    %p96 = scmp.eq.s32.totalorder %s16, 1
    %p97 = por %p95, %p96
    %p98 = scmp.ne.s32.totalorder %s89, %s90
    %p99 = scmp.eq.s32.totalorder %s16, 0
    %p100 = por %p98, %p99
    %p101 = scmp.ne.s32.totalorder %s89, %s90
    %p102 = scmp.eq.s32.totalorder %s17, 1
    %p103 = por %p101, %p102
    %p105 = scmp.ne.s32.totalorder %s90, %s104
    %p106 = scmp.eq.s32.totalorder %s17, 0
    %p107 = por %p105, %p106
    %s109 = sadd.s32 %s108, 1
    %p112 = scmp.eq.s32.totalorder %s11, 1
    %p113 = scmp.ne.s32.totalorder %s108, %s110
    %p114 = scmp.eq.s32.totalorder %s11, 0
    %p115 = por %p113, %p114
    %p116 = scmp.ne.s32.totalorder %s108, %s110
    %p117 = scmp.eq.s32.totalorder %s16, 1
    %p118 = por %p116, %p117
    %p119 = scmp.ne.s32.totalorder %s110, %s111
    %p120 = scmp.eq.s32.totalorder %s16, 0
    %p121 = por %p119, %p120
    %p122 = scmp.ne.s32.totalorder %s110, %s111
    %p123 = scmp.eq.s32.totalorder %s17, 1
    %p124 = por %p122, %p123
    %p126 = scmp.ne.s32.totalorder %s111, %s125
    %p127 = scmp.eq.s32.totalorder %s17, 0
    %p128 = por %p126, %p127
    %s129 = ssub.s32 %s11, %s18
    %p130 = scmp.eq.s32.totalorder %s129, 0
    %s132 = sadd.s32 %s131, 1
    %s133 = scalar_select %p130, %s131, %s132
    %p136 = pneg %p130
    %p137 = scmp.eq.s32.totalorder %s11, 1
    %p138 = por %p136, %p137
    %p139 = scmp.ne.s32.totalorder %s131, %s134
    %p140 = scmp.eq.s32.totalorder %s11, 0
    %p141 = por %p139, %p140
    %p142 = scmp.ne.s32.totalorder %s131, %s134
    %p143 = scmp.eq.s32.totalorder %s16, 1
    %p144 = por %p142, %p143
    %p145 = scmp.ne.s32.totalorder %s134, %s135
    %p146 = scmp.eq.s32.totalorder %s16, 0
    %p147 = por %p145, %p146
    %p148 = scmp.ne.s32.totalorder %s134, %s135
    %p149 = scmp.eq.s32.totalorder %s17, 1
    %p150 = por %p148, %p149
    %p152 = scmp.ne.s32.totalorder %s135, %s151
    %p153 = scmp.eq.s32.totalorder %s17, 0
    %p154 = por %p152, %p153
    %p155 = scmp.le.s32.totalorder 1, %s11
    %p156 = scmp.lt.s32.totalorder %s11, 3
    %p157 = pnand %p155, %p156
    %p158 = pneg %p157
    // Predicated region
    $region9: #{basic_block_apply.1} parent=5 // pred_check
      _
    $region10: #{basic_block_apply.1} parent=5 // pred_check_branch
      %160 = sbr.rel (%p157) target = $region12
    $region11: #{basic_block_apply.1} parent=5 // pred_region
      %s161 = ssub.s32 %s11, 1
      // Predicated region
      $region13: #{basic_block_apply.1} parent=11 // pred_check
        %p162 = pneg %p58
      $region14: #{basic_block_apply.1} parent=11 // pred_check_branch
        %164 = sbr.rel (%p162) target = $region16
      $region15: #{basic_block_apply.1} parent=11 // pred_region
        _
      $region16: #{basic_block_apply.1} parent=11 // pred_fallthru
        _
      // Predicated region
      $region17: #{basic_block_apply.1} parent=11 // pred_check
        %p165 = pneg %p79
      $region18: #{basic_block_apply.1} parent=11 // pred_check_branch
        %167 = sbr.rel (%p165) target = $region20
      $region19: #{basic_block_apply.1} parent=11 // pred_region
        _
      $region20: #{basic_block_apply.1} parent=11 // pred_fallthru
        _
      // Predicated region
      $region21: #{basic_block_apply.1} parent=11 // pred_check
        %p168 = pneg %p100
      $region22: #{basic_block_apply.1} parent=11 // pred_check_branch
        %170 = sbr.rel (%p168) target = $region24
      $region23: #{basic_block_apply.1} parent=11 // pred_region
        _
      $region24: #{basic_block_apply.1} parent=11 // pred_fallthru
        _
      // Predicated region
      $region25: #{basic_block_apply.1} parent=11 // pred_check
        %p171 = pneg %p121
      $region26: #{basic_block_apply.1} parent=11 // pred_check_branch
        %173 = sbr.rel (%p171) target = $region28
      $region27: #{basic_block_apply.1} parent=11 // pred_region
        _
      $region28: #{basic_block_apply.1} parent=11 // pred_fallthru
        _
    $region12: #{basic_block_apply.1} parent=5 // pred_fallthru
      _
    %p174 = scmp.lt.s32.totalorder %s11, 2
    // Predicated region
    $region29: #{basic_block_apply.1} parent=5 // pred_check
      %p175 = pneg %p174
    $region30: #{basic_block_apply.1} parent=5 // pred_check_branch
      %177 = sbr.rel (%p175) target = $region32
    $region31: #{basic_block_apply.1} parent=5 // pred_region
      // Predicated region
      $region33: #{basic_block_apply.1} parent=31 // pred_check
        %p178 = pneg %p31
      $region34: #{basic_block_apply.1} parent=31 // pred_check_branch
        %180 = sbr.rel (%p178) target = $region36
      $region35: #{basic_block_apply.1} parent=31 // pred_region
        %s181 = smul.u32 16, %s11
        %p182 = scmp.lt.s32.totalorder %s181, 31
        %s183 = scalar_select %p182, %s181, 31
        %s184 = smul.addr %s183, 4
        %s185 = scalar_lea.vmem %s0, %s184
        %s186 = smul.u32 16, %s11
      $region36: #{basic_block_apply.1} parent=31 // pred_fallthru
        _
    $region32: #{basic_block_apply.1} parent=5 // pred_fallthru
      _
    %p187 = scmp.le.s32.totalorder 1, %s11
    %p188 = scmp.lt.s32.totalorder %s11, 3
    %p189 = pnand %p187, %p188
    %p190 = pneg %p189
    // Predicated region
    $region37: #{basic_block_apply.1} parent=5 // pred_check
      _
    $region38: #{basic_block_apply.1} parent=5 // pred_check_branch
      %192 = sbr.rel (%p189) target = $region40
    $region39: #{basic_block_apply.1} parent=5 // pred_region
      %s193 = ssub.s32 %s11, 1
      %s194 = smul.u32 16, %s16
      %p195 = scmp.lt.s32.totalorder %s194, 31
      %s196 = scalar_select %p195, %s194, 31
      %s197 = smul.addr %s196, 4
      %s198 = scalar_lea.vmem %s0, %s197
      %p199 = pneg %p37
      %p200 = pneg %p34
      %p201 = pneg %p58
      %p202 = pneg %p55
      %p203 = pneg %p79
      %p204 = pneg %p76
      %p205 = pneg %p100
      %p206 = pneg %p97
      %p207 = pneg %p121
      %p208 = pneg %p118
      %p209 = pneg %p147
      %p210 = pneg %p144
      %s211 = smul.u32 16, %s16
      %p212 = scmp.lt.s32.totalorder %s211, 31
      %s213 = scalar_select %p212, %s211, 31
      %s214 = smul.addr %s213, 8
      %s215 = scalar_lea.vmem %s5, %s214
      %s216 = smul.u32 16, %s16
      %p217 = scmp.lt.s32.totalorder %s216, 31
      %s218 = scalar_select %p217, %s216, 31
      %s219 = smul.addr %s218, 4
      %s220 = scalar_lea.vmem %s0, %s219
      %s221 = smul.u32 16, %s16
      %s222 = smul.u32 16, %s16
      %p223 = scmp.lt.s32.totalorder %s222, 31
      %s224 = scalar_select %p223, %s222, 31
      %s225 = smul.addr %s224, 8
      %s226 = scalar_lea.vmem %s5, %s225
      %s227 = smul.u32 16, %s16
      %v229 = vlaneseq
      %v230 = vshrl.u32 %v229, 7
      %v231 = vadd.s32 %v230, 8
      %v232 = vadd.s32 %v230, 16
      %v233 = vadd.s32 %v230, 24
      %v234 = vadd.s32 %v230, 32
      %v235 = vadd.s32 %v230, 40
      %v236 = vadd.s32 %v230, 48
      %v237 = vadd.s32 %v230, 56
      %v238 = vadd.s32 %v230, 64
      %v239 = vadd.s32 %v230, 72
      %v240 = vadd.s32 %v230, 80
      %v241 = vadd.s32 %v230, 88
      %v242 = vadd.s32 %v230, 96
      %v243 = vadd.s32 %v230, 104
      %v244 = vadd.s32 %v230, 112
      %v245 = vadd.s32 %v230, 120
      %vm246 = vcmp.lt.s32.totalorder %v230, 0
      %v247 = vsub.s32 0, %v230
      %v248 = vsel %vm246, %v247, %v230
      %v249 = vshrl.u32 %v248, 4
      %v250 = vand.u32 %v248, 15
      %v251 = vsub.s32 0, %v250
      %v252 = vsel %vm246, %v251, %v250
      %vm253 = vcmp.lt.s32.totalorder %v231, 0
      %v254 = vsub.s32 0, %v231
      %v255 = vsel %vm253, %v254, %v231
      %v256 = vshrl.u32 %v255, 4
      %v257 = vand.u32 %v255, 15
      %v258 = vsub.s32 0, %v257
      %v259 = vsel %vm253, %v258, %v257
      %vm260 = vcmp.lt.s32.totalorder %v232, 0
      %v261 = vsub.s32 0, %v232
      %v262 = vsel %vm260, %v261, %v232
      %v263 = vshrl.u32 %v262, 4
      %v264 = vand.u32 %v262, 15
      %v265 = vsub.s32 0, %v264
      %v266 = vsel %vm260, %v265, %v264
      %vm267 = vcmp.lt.s32.totalorder %v233, 0
      %v268 = vsub.s32 0, %v233
      %v269 = vsel %vm267, %v268, %v233
      %v270 = vshrl.u32 %v269, 4
      %v271 = vand.u32 %v269, 15
      %v272 = vsub.s32 0, %v271
      %v273 = vsel %vm267, %v272, %v271
      %vm274 = vcmp.lt.s32.totalorder %v234, 0
      %v275 = vsub.s32 0, %v234
      %v276 = vsel %vm274, %v275, %v234
      %v277 = vshrl.u32 %v276, 4
      %v278 = vand.u32 %v276, 15
      %v279 = vsub.s32 0, %v278
      %v280 = vsel %vm274, %v279, %v278
      %vm281 = vcmp.lt.s32.totalorder %v235, 0
      %v282 = vsub.s32 0, %v235
      %v283 = vsel %vm281, %v282, %v235
      %v284 = vshrl.u32 %v283, 4
      %v285 = vand.u32 %v283, 15
      %v286 = vsub.s32 0, %v285
      %v287 = vsel %vm281, %v286, %v285
      %vm288 = vcmp.lt.s32.totalorder %v236, 0
      %v289 = vsub.s32 0, %v236
      %v290 = vsel %vm288, %v289, %v236
      %v291 = vshrl.u32 %v290, 4
      %v292 = vand.u32 %v290, 15
      %v293 = vsub.s32 0, %v292
      %v294 = vsel %vm288, %v293, %v292
      %vm295 = vcmp.lt.s32.totalorder %v237, 0
      %v296 = vsub.s32 0, %v237
      %v297 = vsel %vm295, %v296, %v237
      %v298 = vshrl.u32 %v297, 4
      %v299 = vand.u32 %v297, 15
      %v300 = vsub.s32 0, %v299
      %v301 = vsel %vm295, %v300, %v299
      %vm302 = vcmp.lt.s32.totalorder %v238, 0
      %v303 = vsub.s32 0, %v238
      %v304 = vsel %vm302, %v303, %v238
      %v305 = vshrl.u32 %v304, 4
      %v306 = vand.u32 %v304, 15
      %v307 = vsub.s32 0, %v306
      %v308 = vsel %vm302, %v307, %v306
      %vm309 = vcmp.lt.s32.totalorder %v239, 0
      %v310 = vsub.s32 0, %v239
      %v311 = vsel %vm309, %v310, %v239
      %v312 = vshrl.u32 %v311, 4
      %v313 = vand.u32 %v311, 15
      %v314 = vsub.s32 0, %v313
      %v315 = vsel %vm309, %v314, %v313
      %vm316 = vcmp.lt.s32.totalorder %v240, 0
      %v317 = vsub.s32 0, %v240
      %v318 = vsel %vm316, %v317, %v240
      %v319 = vshrl.u32 %v318, 4
      %v320 = vand.u32 %v318, 15
      %v321 = vsub.s32 0, %v320
      %v322 = vsel %vm316, %v321, %v320
      %vm323 = vcmp.lt.s32.totalorder %v241, 0
      %v324 = vsub.s32 0, %v241
      %v325 = vsel %vm323, %v324, %v241
      %v326 = vshrl.u32 %v325, 4
      %v327 = vand.u32 %v325, 15
      %v328 = vsub.s32 0, %v327
      %v329 = vsel %vm323, %v328, %v327
      %vm330 = vcmp.lt.s32.totalorder %v242, 0
      %v331 = vsub.s32 0, %v242
      %v332 = vsel %vm330, %v331, %v242
      %v333 = vshrl.u32 %v332, 4
      %v334 = vand.u32 %v332, 15
      %v335 = vsub.s32 0, %v334
      %v336 = vsel %vm330, %v335, %v334
      %vm337 = vcmp.lt.s32.totalorder %v243, 0
      %v338 = vsub.s32 0, %v243
      %v339 = vsel %vm337, %v338, %v243
      %v340 = vshrl.u32 %v339, 4
      %v341 = vand.u32 %v339, 15
      %v342 = vsub.s32 0, %v341
      %v343 = vsel %vm337, %v342, %v341
      %vm344 = vcmp.lt.s32.totalorder %v244, 0
      %v345 = vsub.s32 0, %v244
      %v346 = vsel %vm344, %v345, %v244
      %v347 = vshrl.u32 %v346, 4
      %v348 = vand.u32 %v346, 15
      %v349 = vsub.s32 0, %v348
      %v350 = vsel %vm344, %v349, %v348
      %vm351 = vcmp.lt.s32.totalorder %v245, 0
      %v352 = vsub.s32 0, %v245
      %v353 = vsel %vm351, %v352, %v245
      %v354 = vshrl.u32 %v353, 4
      %v355 = vand.u32 %v353, 15
      %v356 = vsub.s32 0, %v355
      %v357 = vsel %vm351, %v356, %v355
      %vm358 = vcmp.ne.s32.totalorder %v252, 0
      %vm359 = vcmp.ne.s32.totalorder %v259, 0
      %vm360 = vcmp.ne.s32.totalorder %v266, 0
      %vm361 = vcmp.ne.s32.totalorder %v273, 0
      %vm362 = vcmp.ne.s32.totalorder %v280, 0
      %vm363 = vcmp.ne.s32.totalorder %v287, 0
      %vm364 = vcmp.ne.s32.totalorder %v294, 0
      %vm365 = vcmp.ne.s32.totalorder %v301, 0
      %vm366 = vcmp.ne.s32.totalorder %v308, 0
      %vm367 = vcmp.ne.s32.totalorder %v315, 0
      %vm368 = vcmp.ne.s32.totalorder %v322, 0
      %vm369 = vcmp.ne.s32.totalorder %v329, 0
      %vm370 = vcmp.ne.s32.totalorder %v336, 0
      %vm371 = vcmp.ne.s32.totalorder %v343, 0
      %vm372 = vcmp.ne.s32.totalorder %v350, 0
      %vm373 = vcmp.ne.s32.totalorder %v357, 0
      %vm374 = vcmp.lt.s32.totalorder %v252, 0
      %vm375 = vcmp.lt.s32.totalorder %v259, 0
      %vm376 = vcmp.lt.s32.totalorder %v266, 0
      %vm377 = vcmp.lt.s32.totalorder %v273, 0
      %vm378 = vcmp.lt.s32.totalorder %v280, 0
      %vm379 = vcmp.lt.s32.totalorder %v287, 0
      %vm380 = vcmp.lt.s32.totalorder %v294, 0
      %vm381 = vcmp.lt.s32.totalorder %v301, 0
      %vm382 = vcmp.lt.s32.totalorder %v308, 0
      %vm383 = vcmp.lt.s32.totalorder %v315, 0
      %vm384 = vcmp.lt.s32.totalorder %v322, 0
      %vm385 = vcmp.lt.s32.totalorder %v329, 0
      %vm386 = vcmp.lt.s32.totalorder %v336, 0
      %vm387 = vcmp.lt.s32.totalorder %v343, 0
      %vm388 = vcmp.lt.s32.totalorder %v350, 0
      %vm389 = vcmp.lt.s32.totalorder %v357, 0
      %vm390 = vmand %vm374, %vm358
      %vm391 = vmand %vm375, %vm359
      %vm392 = vmand %vm376, %vm360
      %vm393 = vmand %vm377, %vm361
      %vm394 = vmand %vm378, %vm362
      %vm395 = vmand %vm379, %vm363
      %vm396 = vmand %vm380, %vm364
      %vm397 = vmand %vm381, %vm365
      %vm398 = vmand %vm382, %vm366
      %vm399 = vmand %vm383, %vm367
      %vm400 = vmand %vm384, %vm368
      %vm401 = vmand %vm385, %vm369
      %vm402 = vmand %vm386, %vm370
      %vm403 = vmand %vm387, %vm371
      %vm404 = vmand %vm388, %vm372
      %vm405 = vmand %vm389, %vm373
      %v406 = vadd.s32 %v252, 16
      %v407 = vadd.s32 %v259, 16
      %v408 = vadd.s32 %v266, 16
      %v409 = vadd.s32 %v273, 16
      %v410 = vadd.s32 %v280, 16
      %v411 = vadd.s32 %v287, 16
      %v412 = vadd.s32 %v294, 16
      %v413 = vadd.s32 %v301, 16
      %v414 = vadd.s32 %v308, 16
      %v415 = vadd.s32 %v315, 16
      %v416 = vadd.s32 %v322, 16
      %v417 = vadd.s32 %v329, 16
      %v418 = vadd.s32 %v336, 16
      %v419 = vadd.s32 %v343, 16
      %v420 = vadd.s32 %v350, 16
      %v421 = vadd.s32 %v357, 16
      %v422 = vsel %vm390, %v406, %v252
      %v423 = vsel %vm391, %v407, %v259
      %v424 = vsel %vm392, %v408, %v266
      %v425 = vsel %vm393, %v409, %v273
      %v426 = vsel %vm394, %v410, %v280
      %v427 = vsel %vm395, %v411, %v287
      %v428 = vsel %vm396, %v412, %v294
      %v429 = vsel %vm397, %v413, %v301
      %v430 = vsel %vm398, %v414, %v308
      %v431 = vsel %vm399, %v415, %v315
      %v432 = vsel %vm400, %v416, %v322
      %v433 = vsel %vm401, %v417, %v329
      %v434 = vsel %vm402, %v418, %v336
      %v435 = vsel %vm403, %v419, %v343
      %v436 = vsel %vm404, %v420, %v350
      %v437 = vsel %vm405, %v421, %v357
      %vm438 = vcmp.ne.s32.totalorder %v422, 0
      %vm439 = vcmp.ne.s32.totalorder %v423, 0
      %vm440 = vcmp.ne.s32.totalorder %v424, 0
      %vm441 = vcmp.ne.s32.totalorder %v425, 0
      %vm442 = vcmp.ne.s32.totalorder %v426, 0
      %vm443 = vcmp.ne.s32.totalorder %v427, 0
      %vm444 = vcmp.ne.s32.totalorder %v428, 0
      %vm445 = vcmp.ne.s32.totalorder %v429, 0
      %vm446 = vcmp.ne.s32.totalorder %v430, 0
      %vm447 = vcmp.ne.s32.totalorder %v431, 0
      %vm448 = vcmp.ne.s32.totalorder %v432, 0
      %vm449 = vcmp.ne.s32.totalorder %v433, 0
      %vm450 = vcmp.ne.s32.totalorder %v434, 0
      %vm451 = vcmp.ne.s32.totalorder %v435, 0
      %vm452 = vcmp.ne.s32.totalorder %v436, 0
      %vm453 = vcmp.ne.s32.totalorder %v437, 0
      %vm454 = vcmp.ne.s32.totalorder %v422, 15
      %vm455 = vcmp.ne.s32.totalorder %v423, 15
      %vm456 = vcmp.ne.s32.totalorder %v424, 15
      %vm457 = vcmp.ne.s32.totalorder %v425, 15
      %vm458 = vcmp.ne.s32.totalorder %v426, 15
      %vm459 = vcmp.ne.s32.totalorder %v427, 15
      %vm460 = vcmp.ne.s32.totalorder %v428, 15
      %vm461 = vcmp.ne.s32.totalorder %v429, 15
      %vm462 = vcmp.ne.s32.totalorder %v430, 15
      %vm463 = vcmp.ne.s32.totalorder %v431, 15
      %vm464 = vcmp.ne.s32.totalorder %v432, 15
      %vm465 = vcmp.ne.s32.totalorder %v433, 15
      %vm466 = vcmp.ne.s32.totalorder %v434, 15
      %vm467 = vcmp.ne.s32.totalorder %v435, 15
      %vm468 = vcmp.ne.s32.totalorder %v436, 15
      %vm469 = vcmp.ne.s32.totalorder %v437, 15
      %v470 = vld [vmem:[%s220] sm:$0xf]
      %v471 = vld [vmem:[%s220 + $0x4] sm:$0xf]
      %v472 = vld [vmem:[%s220 + $0x8] sm:$0xf]
      %v473 = vld [vmem:[%s220 + $0xc] sm:$0xf]
      %v474 = vld [vmem:[%s220 + $0x10] sm:$0xf]
      %v475 = vld [vmem:[%s220 + $0x14] sm:$0xf]
      %v476 = vld [vmem:[%s220 + $0x18] sm:$0xf]
      %v477 = vld [vmem:[%s220 + $0x1c] sm:$0xf]
      %v478 = vld [vmem:[%s220 + $0x20] sm:$0xf]
      %v479 = vld [vmem:[%s220 + $0x24] sm:$0xf]
      %v480 = vld [vmem:[%s220 + $0x28] sm:$0xf]
      %v481 = vld [vmem:[%s220 + $0x2c] sm:$0xf]
      %v482 = vld [vmem:[%s220 + $0x30] sm:$0xf]
      %v483 = vld [vmem:[%s220 + $0x34] sm:$0xf]
      %v484 = vld [vmem:[%s220 + $0x38] sm:$0xf]
      %v485 = vld [vmem:[%s220 + $0x3c] sm:$0xf]
      %v486 = vld [vmem:[%s1] sm:$0xff]
      %v487 = vld [vmem:[%s1 + $0x8] sm:$0xf]
      %v488 = vld [vmem:[%s1 + $0xc] sm:$0xff]
      %v489 = vld [vmem:[%s1 + $0x14] sm:$0xf]
      %v490 = vld [vmem:[%s1 + $0x18] sm:$0xff]
      %v491 = vld [vmem:[%s1 + $0x20] sm:$0xf]
      %v492 = vld [vmem:[%s1 + $0x24] sm:$0xff]
      %v493 = vld [vmem:[%s1 + $0x2c] sm:$0xf]
      %v494 = vld [vmem:[%s1 + $0x30] sm:$0xff]
      %v495 = vld [vmem:[%s1 + $0x38] sm:$0xf]
      %v496 = vld [vmem:[%s1 + $0x3c] sm:$0xff]
      %v497 = vld [vmem:[%s1 + $0x44] sm:$0xf]
      %v498 = vld [vmem:[%s1 + $0x48] sm:$0xff]
      %v499 = vld [vmem:[%s1 + $0x50] sm:$0xf]
      %v500 = vld [vmem:[%s1 + $0x54] sm:$0xff]
      %v501 = vld [vmem:[%s1 + $0x5c] sm:$0xf]
      %v502 = vld [vmem:[%s1 + $0x60] sm:$0xff]
      %v503 = vld [vmem:[%s1 + $0x68] sm:$0xf]
      %v504 = vld [vmem:[%s1 + $0x6c] sm:$0xff]
      %v505 = vld [vmem:[%s1 + $0x74] sm:$0xf]
      %v506 = vld [vmem:[%s1 + $0x78] sm:$0xff]
      %v507 = vld [vmem:[%s1 + $0x80] sm:$0xf]
      %v508 = vld [vmem:[%s1 + $0x84] sm:$0xff]
      %v509 = vld [vmem:[%s1 + $0x8c] sm:$0xf]
      %v510 = vld [vmem:[%s1 + $0x90] sm:$0xff]
      %v511 = vld [vmem:[%s1 + $0x98] sm:$0xf]
      %v512 = vld [vmem:[%s1 + $0x9c] sm:$0xff]
      %v513 = vld [vmem:[%s1 + $0xa4] sm:$0xf]
      %v514 = vld [vmem:[%s1 + $0xa8] sm:$0xff]
      %v515 = vld [vmem:[%s1 + $0xb0] sm:$0xf]
      %v516 = vld [vmem:[%s1 + $0xb4] sm:$0xff]
      %v517 = vld [vmem:[%s1 + $0xbc] sm:$0xf]
      %v534 = vunpack.c.l.b16 %v470
      %v535 = vunpack.c.l.b16 %v471
      %v536 = vunpack.c.l.b16 %v472
      %v537 = vunpack.c.l.b16 %v473
      %v538 = vunpack.c.l.b16 %v474
      %v539 = vunpack.c.l.b16 %v475
      %v540 = vunpack.c.l.b16 %v476
      %v541 = vunpack.c.l.b16 %v477
      %v542 = vunpack.c.l.b16 %v478
      %v543 = vunpack.c.l.b16 %v479
      %v544 = vunpack.c.l.b16 %v480
      %v545 = vunpack.c.l.b16 %v481
      %v546 = vunpack.c.l.b16 %v482
      %v547 = vunpack.c.l.b16 %v483
      %v548 = vunpack.c.l.b16 %v484
      %v549 = vunpack.c.l.b16 %v485
      %v550 = vpack.c.b16 %v535, %v534
      %v551 = vpack.c.b16 %v537, %v536
      %v552 = vpack.c.b16 %v539, %v538
      %v553 = vpack.c.b16 %v541, %v540
      %v554 = vpack.c.b16 %v543, %v542
      %v555 = vpack.c.b16 %v545, %v544
      %v556 = vpack.c.b16 %v547, %v546
      %v557 = vpack.c.b16 %v549, %v548
      %v598 = vunpack.c.l.b16 %v486
      %v599 = vunpack.c.h.b16 %v486
      %v600 = vunpack.c.l.b16 %v487
      %v601 = vunpack.c.l.b16 %v488
      %v602 = vunpack.c.h.b16 %v488
      %v603 = vunpack.c.l.b16 %v489
      %v604 = vunpack.c.l.b16 %v490
      %v605 = vunpack.c.h.b16 %v490
      %v606 = vunpack.c.l.b16 %v491
      %v607 = vunpack.c.l.b16 %v492
      %v608 = vunpack.c.h.b16 %v492
      %v609 = vunpack.c.l.b16 %v493
      %v610 = vunpack.c.l.b16 %v494
      %v611 = vunpack.c.h.b16 %v494
      %v612 = vunpack.c.l.b16 %v495
      %v613 = vunpack.c.l.b16 %v496
      %v614 = vunpack.c.h.b16 %v496
      %v615 = vunpack.c.l.b16 %v497
      %v616 = vunpack.c.l.b16 %v498
      %v617 = vunpack.c.h.b16 %v498
      %v618 = vunpack.c.l.b16 %v499
      %v619 = vunpack.c.l.b16 %v500
      %v620 = vunpack.c.h.b16 %v500
      %v621 = vunpack.c.l.b16 %v501
      %v622 = vunpack.c.l.b16 %v502
      %v623 = vunpack.c.h.b16 %v502
      %v624 = vunpack.c.l.b16 %v503
      %v625 = vunpack.c.l.b16 %v504
      %v626 = vunpack.c.h.b16 %v504
      %v627 = vunpack.c.l.b16 %v505
      %v628 = vunpack.c.l.b16 %v506
      %v629 = vunpack.c.h.b16 %v506
      %v630 = vunpack.c.l.b16 %v507
      %v631 = vunpack.c.l.b16 %v508
      %v632 = vunpack.c.h.b16 %v508
      %v633 = vunpack.c.l.b16 %v509
      %v634 = vunpack.c.l.b16 %v510
      %v635 = vunpack.c.h.b16 %v510
      %v636 = vunpack.c.l.b16 %v511
      %v637 = vunpack.c.l.b16 %v512
      %v638 = vunpack.c.h.b16 %v512
      %v639 = vunpack.c.l.b16 %v513
      %v640 = vunpack.c.l.b16 %v514
      %v641 = vunpack.c.h.b16 %v514
      %v642 = vunpack.c.l.b16 %v515
      %v643 = vunpack.c.l.b16 %v516
      %v644 = vunpack.c.h.b16 %v516
      %v645 = vunpack.c.l.b16 %v517
      %v646 = vpack.c.b16 %v601, %v598
      %v647 = vpack.c.b16 %v602, %v599
      %v648 = vpack.c.b16 %v603, %v600
      %v649 = vpack.c.b16 %v607, %v604
      %v650 = vpack.c.b16 %v608, %v605
      %v651 = vpack.c.b16 %v609, %v606
      %v652 = vpack.c.b16 %v613, %v610
      %v653 = vpack.c.b16 %v614, %v611
      %v654 = vpack.c.b16 %v615, %v612
      %v655 = vpack.c.b16 %v619, %v616
      %v656 = vpack.c.b16 %v620, %v617
      %v657 = vpack.c.b16 %v621, %v618
      %v658 = vpack.c.b16 %v625, %v622
      %v659 = vpack.c.b16 %v626, %v623
      %v660 = vpack.c.b16 %v627, %v624
      %v661 = vpack.c.b16 %v631, %v628
      %v662 = vpack.c.b16 %v632, %v629
      %v663 = vpack.c.b16 %v633, %v630
      %v664 = vpack.c.b16 %v637, %v634
      %v665 = vpack.c.b16 %v638, %v635
      %v666 = vpack.c.b16 %v639, %v636
      %v667 = vpack.c.b16 %v643, %v640
      %v668 = vpack.c.b16 %v644, %v641
      %v669 = vpack.c.b16 %v645, %v642
      %694 = vmatprep.subr.bf16.mxu0 %v647
      %695 = vmatpush1.bf16.msra.mxu0 %v646
      %696 = vmatprep.subr.bf16.mxu0 %v650
      %697 = vmatpush1.bf16.msra.mxu0 %v649
      %698 = vmatprep.subr.bf16.mxu0 %v653
      %699 = vmatpush1.bf16.msra.mxu0 %v652
      %700 = vmatprep.subr.bf16.mxu0 %v656
      %701 = vmatpush1.bf16.msra.mxu0 %v655
      %702 = vmatprep.subr.bf16.mxu0 %v659
      %703 = vmatpush1.bf16.msra.mxu0 %v658
      %704 = vmatprep.subr.bf16.mxu0 %v662
      %705 = vmatpush1.bf16.msra.mxu0 %v661
      %706 = vmatprep.subr.bf16.mxu0 %v665
      %707 = vmatpush1.bf16.msra.mxu0 %v664
      %708 = vmatprep.subr.bf16.mxu0 %v668
      %709 = vmatpush1.bf16.msra.mxu0 %v667
      %710 = vmatprep.subr.bf16.mxu0 0
      %711 = vmatpush1.bf16.msra.mxu0 0
      %712 = vmatprep.subr.bf16.mxu0 0
      %713 = vmatpush1.bf16.msra.mxu0 0
      %714 = vmatprep.subr.bf16.mxu0 0
      %715 = vmatpush1.bf16.msra.mxu0 0
      %716 = vmatprep.subr.bf16.mxu0 0
      %717 = vmatpush1.bf16.msra.mxu0 0
      %718 = vmatprep.subr.bf16.mxu0 0
      %719 = vmatpush1.bf16.msra.mxu0 0
      %720 = vmatprep.subr.bf16.mxu0 0
      %721 = vmatpush1.bf16.msra.mxu0 0
      %722 = vmatprep.subr.bf16.mxu0 0
      %723 = vmatpush1.bf16.msra.mxu0 0
      %724 = vmatprep.subr.bf16.mxu0 0
      %725 = vmatpush1.bf16.msra.mxu0 0
      %726 = vmatprep.mubr.bf16.mxu0 0
      %727 = vmatmul.mubr.bf16.gmra.mrb[0].mxu0 %v550
      %v728 = vpop.f32.mrb[0].mxu0
      %v729 = vadd.f32 0.0, %v728
      %v730 = vpop.f32.mrb[0].mxu0
      %v731 = vadd.f32 0.0, %v730
      %v732 = vpop.f32.mrb[0].mxu0
      %v733 = vadd.f32 0.0, %v732
      %v734 = vpop.f32.mrb[0].mxu0
      %v735 = vadd.f32 0.0, %v734
      %736 = vmatprep.mubr.bf16.mxu0 0
      %737 = vmatmul.mubr.bf16.gmra.mrb[0].mxu0 %v551
      %v738 = vpop.f32.mrb[0].mxu0
      %v739 = vadd.f32 0.0, %v738
      %v740 = vpop.f32.mrb[0].mxu0
      %v741 = vadd.f32 0.0, %v740
      %v742 = vpop.f32.mrb[0].mxu0
      %v743 = vadd.f32 0.0, %v742
      %v744 = vpop.f32.mrb[0].mxu0
      %v745 = vadd.f32 0.0, %v744
      %746 = vmatprep.mubr.bf16.mxu0 0
      %747 = vmatmul.mubr.bf16.gmra.mrb[0].mxu0 %v552
      %v748 = vpop.f32.mrb[0].mxu0
      %v749 = vadd.f32 0.0, %v748
      %v750 = vpop.f32.mrb[0].mxu0
      %v751 = vadd.f32 0.0, %v750
      %v752 = vpop.f32.mrb[0].mxu0
      %v753 = vadd.f32 0.0, %v752
      %v754 = vpop.f32.mrb[0].mxu0
      %v755 = vadd.f32 0.0, %v754
      %756 = vmatprep.mubr.bf16.mxu0 0
      %757 = vmatmul.mubr.bf16.gmra.mrb[0].mxu0 %v553
      %v758 = vpop.f32.mrb[0].mxu0
      %v759 = vadd.f32 0.0, %v758
      %v760 = vpop.f32.mrb[0].mxu0
      %v761 = vadd.f32 0.0, %v760
      %v762 = vpop.f32.mrb[0].mxu0
      %v763 = vadd.f32 0.0, %v762
      %v764 = vpop.f32.mrb[0].mxu0
      %v765 = vadd.f32 0.0, %v764
      %766 = vmatprep.mubr.bf16.mxu0 0
      %767 = vmatmul.mubr.bf16.gmra.mrb[0].mxu0 %v554
      %v768 = vpop.f32.mrb[0].mxu0
      %v769 = vadd.f32 0.0, %v768
      %v770 = vpop.f32.mrb[0].mxu0
      %v771 = vadd.f32 0.0, %v770
      %v772 = vpop.f32.mrb[0].mxu0
      %v773 = vadd.f32 0.0, %v772
      %v774 = vpop.f32.mrb[0].mxu0
      %v775 = vadd.f32 0.0, %v774
      %776 = vmatprep.mubr.bf16.mxu0 0
      %777 = vmatmul.mubr.bf16.gmra.mrb[0].mxu0 %v555
      %v778 = vpop.f32.mrb[0].mxu0
      %v779 = vadd.f32 0.0, %v778
      %v780 = vpop.f32.mrb[0].mxu0
      %v781 = vadd.f32 0.0, %v780
      %v782 = vpop.f32.mrb[0].mxu0
      %v783 = vadd.f32 0.0, %v782
      %v784 = vpop.f32.mrb[0].mxu0
      %v785 = vadd.f32 0.0, %v784
      %786 = vmatprep.mubr.bf16.mxu0 0
      %787 = vmatmul.mubr.bf16.gmra.mrb[0].mxu0 %v556
      %v788 = vpop.f32.mrb[0].mxu0
      %v789 = vadd.f32 0.0, %v788
      %v790 = vpop.f32.mrb[0].mxu0
      %v791 = vadd.f32 0.0, %v790
      %v792 = vpop.f32.mrb[0].mxu0
      %v793 = vadd.f32 0.0, %v792
      %v794 = vpop.f32.mrb[0].mxu0
      %v795 = vadd.f32 0.0, %v794
      %796 = vmatprep.mubr.bf16.mxu0 0
      %797 = vmatmul.mubr.bf16.gmra.mrb[0].mxu0 %v557
      %v798 = vpop.f32.mrb[0].mxu0
      %v799 = vadd.f32 0.0, %v798
      %v800 = vpop.f32.mrb[0].mxu0
      %v801 = vadd.f32 0.0, %v800
      %v802 = vpop.f32.mrb[0].mxu0
      %v803 = vadd.f32 0.0, %v802
      %v804 = vpop.f32.mrb[0].mxu0
      %v805 = vadd.f32 0.0, %v804
      %806 = vdwg.mxu0
      %807 = vmatprep.subr.bf16.mxu0 0
      %808 = vmatpush1.bf16.msra.mxu0 %v648
      %809 = vmatprep.subr.bf16.mxu0 0
      %810 = vmatpush1.bf16.msra.mxu0 %v651
      %811 = vmatprep.subr.bf16.mxu0 0
      %812 = vmatpush1.bf16.msra.mxu0 %v654
      %813 = vmatprep.subr.bf16.mxu0 0
      %814 = vmatpush1.bf16.msra.mxu0 %v657
      %815 = vmatprep.subr.bf16.mxu0 0
      %816 = vmatpush1.bf16.msra.mxu0 %v660
      %817 = vmatprep.subr.bf16.mxu0 0
      %818 = vmatpush1.bf16.msra.mxu0 %v663
      %819 = vmatprep.subr.bf16.mxu0 0
      %820 = vmatpush1.bf16.msra.mxu0 %v666
      %821 = vmatprep.subr.bf16.mxu0 0
      %822 = vmatpush1.bf16.msra.mxu0 %v669
      %823 = vmatprep.subr.bf16.mxu0 0
      %824 = vmatpush1.bf16.msra.mxu0 0
      %825 = vmatprep.subr.bf16.mxu0 0
      %826 = vmatpush1.bf16.msra.mxu0 0
      %827 = vmatprep.subr.bf16.mxu0 0
      %828 = vmatpush1.bf16.msra.mxu0 0
      %829 = vmatprep.subr.bf16.mxu0 0
      %830 = vmatpush1.bf16.msra.mxu0 0
      %831 = vmatprep.subr.bf16.mxu0 0
      %832 = vmatpush1.bf16.msra.mxu0 0
      %833 = vmatprep.subr.bf16.mxu0 0
      %834 = vmatpush1.bf16.msra.mxu0 0
      %835 = vmatprep.subr.bf16.mxu0 0
      %836 = vmatpush1.bf16.msra.mxu0 0
      %837 = vmatprep.subr.bf16.mxu0 0
      %838 = vmatpush1.bf16.msra.mxu0 0
      %839 = vmatprep.mubr.bf16.mxu0 0
      %840 = vmatmul.mubr.bf16.gmra.mrb[0].mxu0 %v550
      %v841 = vpop.f32.mrb[0].mxu0
      %v842 = vadd.f32 0.0, %v841
      %v843 = vpop.f32.mrb[0].mxu0
      %v844 = vpop.f32.mrb[0].mxu0
      %v845 = vadd.f32 0.0, %v844
      %v846 = vpop.f32.mrb[0].mxu0
      %847 = vmatprep.mubr.bf16.mxu0 0
      %848 = vmatmul.mubr.bf16.gmra.mrb[0].mxu0 %v551
      %v849 = vpop.f32.mrb[0].mxu0
      %v850 = vadd.f32 0.0, %v849
      %v851 = vpop.f32.mrb[0].mxu0
      %v852 = vpop.f32.mrb[0].mxu0
      %v853 = vadd.f32 0.0, %v852
      %v854 = vpop.f32.mrb[0].mxu0
      %855 = vmatprep.mubr.bf16.mxu0 0
      %856 = vmatmul.mubr.bf16.gmra.mrb[0].mxu0 %v552
      %v857 = vpop.f32.mrb[0].mxu0
      %v858 = vadd.f32 0.0, %v857
      %v859 = vpop.f32.mrb[0].mxu0
      %v860 = vpop.f32.mrb[0].mxu0
      %v861 = vadd.f32 0.0, %v860
      %v862 = vpop.f32.mrb[0].mxu0
      %863 = vmatprep.mubr.bf16.mxu0 0
      %864 = vmatmul.mubr.bf16.gmra.mrb[0].mxu0 %v553
      %v865 = vpop.f32.mrb[0].mxu0
      %v866 = vadd.f32 0.0, %v865
      %v867 = vpop.f32.mrb[0].mxu0
      %v868 = vpop.f32.mrb[0].mxu0
      %v869 = vadd.f32 0.0, %v868
      %v870 = vpop.f32.mrb[0].mxu0
      %871 = vmatprep.mubr.bf16.mxu0 0
      %872 = vmatmul.mubr.bf16.gmra.mrb[0].mxu0 %v554
      %v873 = vpop.f32.mrb[0].mxu0
      %v874 = vadd.f32 0.0, %v873
      %v875 = vpop.f32.mrb[0].mxu0
      %v876 = vpop.f32.mrb[0].mxu0
      %v877 = vadd.f32 0.0, %v876
      %v878 = vpop.f32.mrb[0].mxu0
      %879 = vmatprep.mubr.bf16.mxu0 0
      %880 = vmatmul.mubr.bf16.gmra.mrb[0].mxu0 %v555
      %v881 = vpop.f32.mrb[0].mxu0
      %v882 = vadd.f32 0.0, %v881
      %v883 = vpop.f32.mrb[0].mxu0
      %v884 = vpop.f32.mrb[0].mxu0
      %v885 = vadd.f32 0.0, %v884
      %v886 = vpop.f32.mrb[0].mxu0
      %887 = vmatprep.mubr.bf16.mxu0 0
      %888 = vmatmul.mubr.bf16.gmra.mrb[0].mxu0 %v556
      %v889 = vpop.f32.mrb[0].mxu0
      %v890 = vadd.f32 0.0, %v889
      %v891 = vpop.f32.mrb[0].mxu0
      %v892 = vpop.f32.mrb[0].mxu0
      %v893 = vadd.f32 0.0, %v892
      %v894 = vpop.f32.mrb[0].mxu0
      %895 = vmatprep.mubr.bf16.mxu0 0
      %896 = vmatmul.mubr.bf16.gmra.mrb[0].mxu0 %v557
      %v897 = vpop.f32.mrb[0].mxu0
      %v898 = vadd.f32 0.0, %v897
      %v899 = vpop.f32.mrb[0].mxu0
      %v900 = vpop.f32.mrb[0].mxu0
      %v901 = vadd.f32 0.0, %v900
      %v902 = vpop.f32.mrb[0].mxu0
      %903 = vdwg.mxu0
      %v904 = vrot.slane %v729, 7
      %v905 = vrot.slane %v733, 7
      %v906 = vrot.slane %v739, 7
      %v907 = vrot.slane %v743, 7
      %v908 = vrot.slane %v749, 7
      %v909 = vrot.slane %v753, 7
      %v910 = vrot.slane %v759, 7
      %v911 = vrot.slane %v763, 7
      %v912 = vrot.slane %v769, 7
      %v913 = vrot.slane %v773, 7
      %v914 = vrot.slane %v779, 7
      %v915 = vrot.slane %v783, 7
      %v916 = vrot.slane %v789, 7
      %v917 = vrot.slane %v793, 7
      %v918 = vrot.slane %v799, 7
      %v919 = vrot.slane %v803, 7
      %vm920 = vcmp.lt.s32.totalorder %v230, 1
      %v921 = vsel %vm920, %v918, %v919
      %v922 = vsel %vm920, %v917, %v918
      %v923 = vsel %vm920, %v916, %v917
      %v924 = vsel %vm920, %v915, %v916
      %v925 = vsel %vm920, %v914, %v915
      %v926 = vsel %vm920, %v913, %v914
      %v927 = vsel %vm920, %v912, %v913
      %v928 = vsel %vm920, %v911, %v912
      %v929 = vsel %vm920, %v910, %v911
      %v930 = vsel %vm920, %v909, %v910
      %v931 = vsel %vm920, %v908, %v909
      %v932 = vsel %vm920, %v907, %v908
      %v933 = vsel %vm920, %v906, %v907
      %v934 = vsel %vm920, %v905, %v906
      %v935 = vsel %vm920, %v904, %v905
      %v936 = vsel %vm920, %v919, %v904
      %v937 = vsel %vm438, %v936, 0.0
      %v938 = vsel %vm439, %v935, 0.0
      %v939 = vsel %vm440, %v934, 0.0
      %v940 = vsel %vm441, %v933, 0.0
      %v941 = vsel %vm442, %v932, 0.0
      %v942 = vsel %vm443, %v931, 0.0
      %v943 = vsel %vm444, %v930, 0.0
      %v944 = vsel %vm445, %v929, 0.0
      %v945 = vsel %vm446, %v928, 0.0
      %v946 = vsel %vm447, %v927, 0.0
      %v947 = vsel %vm448, %v926, 0.0
      %v948 = vsel %vm449, %v925, 0.0
      %v949 = vsel %vm450, %v924, 0.0
      %v950 = vsel %vm451, %v923, 0.0
      %v951 = vsel %vm452, %v922, 0.0
      %v952 = vsel %vm453, %v921, 0.0
      %v953 = vrot.slane %v842, 1
      %v954 = vrot.slane %v845, 1
      %v955 = vrot.slane %v850, 1
      %v956 = vrot.slane %v853, 1
      %v957 = vrot.slane %v858, 1
      %v958 = vrot.slane %v861, 1
      %v959 = vrot.slane %v866, 1
      %v960 = vrot.slane %v869, 1
      %v961 = vrot.slane %v874, 1
      %v962 = vrot.slane %v877, 1
      %v963 = vrot.slane %v882, 1
      %v964 = vrot.slane %v885, 1
      %v965 = vrot.slane %v890, 1
      %v966 = vrot.slane %v893, 1
      %v967 = vrot.slane %v898, 1
      %v968 = vrot.slane %v901, 1
      %vm969 = vcmp.lt.s32.totalorder %v230, 7
      %v970 = vsel %vm969, %v967, %v968
      %v971 = vsel %vm969, %v966, %v967
      %v972 = vsel %vm969, %v965, %v966
      %v973 = vsel %vm969, %v964, %v965
      %v974 = vsel %vm969, %v963, %v964
      %v975 = vsel %vm969, %v962, %v963
      %v976 = vsel %vm969, %v961, %v962
      %v977 = vsel %vm969, %v960, %v961
      %v978 = vsel %vm969, %v959, %v960
      %v979 = vsel %vm969, %v958, %v959
      %v980 = vsel %vm969, %v957, %v958
      %v981 = vsel %vm969, %v956, %v957
      %v982 = vsel %vm969, %v955, %v956
      %v983 = vsel %vm969, %v954, %v955
      %v984 = vsel %vm969, %v953, %v954
      %v985 = vsel %vm969, %v968, %v953
      %v986 = vsel %vm454, %v984, 0.0
      %v987 = vsel %vm455, %v983, 0.0
      %v988 = vsel %vm456, %v982, 0.0
      %v989 = vsel %vm457, %v981, 0.0
      %v990 = vsel %vm458, %v980, 0.0
      %v991 = vsel %vm459, %v979, 0.0
      %v992 = vsel %vm460, %v978, 0.0
      %v993 = vsel %vm461, %v977, 0.0
      %v994 = vsel %vm462, %v976, 0.0
      %v995 = vsel %vm463, %v975, 0.0
      %v996 = vsel %vm464, %v974, 0.0
      %v997 = vsel %vm465, %v973, 0.0
      %v998 = vsel %vm466, %v972, 0.0
      %v999 = vsel %vm467, %v971, 0.0
      %v1000 = vsel %vm468, %v970, 0.0
      %v1001 = vsel %vm469, %v985, 0.0
      %v1002 = vadd.f32 %v731, %v937
      %v1003 = vadd.f32 %v735, %v938
      %v1004 = vadd.f32 %v741, %v939
      %v1005 = vadd.f32 %v745, %v940
      %v1006 = vadd.f32 %v751, %v941
      %v1007 = vadd.f32 %v755, %v942
      %v1008 = vadd.f32 %v761, %v943
      %v1009 = vadd.f32 %v765, %v944
      %v1010 = vadd.f32 %v771, %v945
      %v1011 = vadd.f32 %v775, %v946
      %v1012 = vadd.f32 %v781, %v947
      %v1013 = vadd.f32 %v785, %v948
      %v1014 = vadd.f32 %v791, %v949
      %v1015 = vadd.f32 %v795, %v950
      %v1016 = vadd.f32 %v801, %v951
      %v1017 = vadd.f32 %v805, %v952
      %v1018 = vadd.f32 %v1002, %v986
      %v1019 = vadd.f32 %v1003, %v987
      %v1020 = vadd.f32 %v1004, %v988
      %v1021 = vadd.f32 %v1005, %v989
      %v1022 = vadd.f32 %v1006, %v990
      %v1023 = vadd.f32 %v1007, %v991
      %v1024 = vadd.f32 %v1008, %v992
      %v1025 = vadd.f32 %v1009, %v993
      %v1026 = vadd.f32 %v1010, %v994
      %v1027 = vadd.f32 %v1011, %v995
      %v1028 = vadd.f32 %v1012, %v996
      %v1029 = vadd.f32 %v1013, %v997
      %v1030 = vadd.f32 %v1014, %v998
      %v1031 = vadd.f32 %v1015, %v999
      %v1032 = vadd.f32 %v1016, %v1000
      %v1033 = vadd.f32 %v1017, %v1001
      %v1034 = vld [vmem:[%s2] sm:$0x1]
      %v1036 = vlaneseq
      %v1037 = vshrl.u32 %v1036, 7
      %v1038 = vsub.s32 0, %v1037
      %v1039 = vrot.slane %v1034, %v1038
      %v1041 = vadd.f32 %v1018, %v1039
      %v1042 = vadd.f32 %v1019, %v1039
      %v1043 = vadd.f32 %v1020, %v1039
      %v1044 = vadd.f32 %v1021, %v1039
      %v1045 = vadd.f32 %v1022, %v1039
      %v1046 = vadd.f32 %v1023, %v1039
      %v1047 = vadd.f32 %v1024, %v1039
      %v1048 = vadd.f32 %v1025, %v1039
      %v1049 = vadd.f32 %v1026, %v1039
      %v1050 = vadd.f32 %v1027, %v1039
      %v1051 = vadd.f32 %v1028, %v1039
      %v1052 = vadd.f32 %v1029, %v1039
      %v1053 = vadd.f32 %v1030, %v1039
      %v1054 = vadd.f32 %v1031, %v1039
      %v1055 = vadd.f32 %v1032, %v1039
      %v1056 = vadd.f32 %v1033, %v1039
      %v1057 = vmax.f32 %v1041, 0.0
      %v1058 = vmax.f32 %v1042, 0.0
      %v1059 = vmax.f32 %v1043, 0.0
      %v1060 = vmax.f32 %v1044, 0.0
      %v1061 = vmax.f32 %v1045, 0.0
      %v1062 = vmax.f32 %v1046, 0.0
      %v1063 = vmax.f32 %v1047, 0.0
      %v1064 = vmax.f32 %v1048, 0.0
      %v1065 = vmax.f32 %v1049, 0.0
      %v1066 = vmax.f32 %v1050, 0.0
      %v1067 = vmax.f32 %v1051, 0.0
      %v1068 = vmax.f32 %v1052, 0.0
      %v1069 = vmax.f32 %v1053, 0.0
      %v1070 = vmax.f32 %v1054, 0.0
      %v1071 = vmax.f32 %v1055, 0.0
      %v1072 = vmax.f32 %v1056, 0.0
      %v1073 = vpack.c.bf16 %v1058, %v1057
      %v1074 = vpack.c.bf16 %v1060, %v1059
      %v1075 = vpack.c.bf16 %v1062, %v1061
      %v1076 = vpack.c.bf16 %v1064, %v1063
      %v1077 = vpack.c.bf16 %v1066, %v1065
      %v1078 = vpack.c.bf16 %v1068, %v1067
      %v1079 = vpack.c.bf16 %v1070, %v1069
      %v1080 = vpack.c.bf16 %v1072, %v1071
      %v1081 = vld [vmem:[%s3] sm:$0xff]
      %v1082 = vld [vmem:[%s3 + $0x8] sm:$0xf]
      %v1083 = vld [vmem:[%s3 + $0xc] sm:$0xff]
      %v1084 = vld [vmem:[%s3 + $0x14] sm:$0xf]
      %v1085 = vld [vmem:[%s3 + $0x18] sm:$0xff]
      %v1086 = vld [vmem:[%s3 + $0x20] sm:$0xf]
      %v1087 = vld [vmem:[%s3 + $0x24] sm:$0xff]
      %v1088 = vld [vmem:[%s3 + $0x2c] sm:$0xf]
      %v1089 = vld [vmem:[%s3 + $0x30] sm:$0xff]
      %v1090 = vld [vmem:[%s3 + $0x38] sm:$0xf]
      %v1091 = vld [vmem:[%s3 + $0x3c] sm:$0xff]
      %v1092 = vld [vmem:[%s3 + $0x44] sm:$0xf]
      %v1093 = vld [vmem:[%s3 + $0x48] sm:$0xff]
      %v1094 = vld [vmem:[%s3 + $0x50] sm:$0xf]
      %v1095 = vld [vmem:[%s3 + $0x54] sm:$0xff]
      %v1096 = vld [vmem:[%s3 + $0x5c] sm:$0xf]
      %v1097 = vld [vmem:[%s3 + $0x60] sm:$0xff]
      %v1098 = vld [vmem:[%s3 + $0x68] sm:$0xf]
      %v1099 = vld [vmem:[%s3 + $0x6c] sm:$0xff]
      %v1100 = vld [vmem:[%s3 + $0x74] sm:$0xf]
      %v1101 = vld [vmem:[%s3 + $0x78] sm:$0xff]
      %v1102 = vld [vmem:[%s3 + $0x80] sm:$0xf]
      %v1103 = vld [vmem:[%s3 + $0x84] sm:$0xff]
      %v1104 = vld [vmem:[%s3 + $0x8c] sm:$0xf]
      %v1105 = vld [vmem:[%s3 + $0x90] sm:$0xff]
      %v1106 = vld [vmem:[%s3 + $0x98] sm:$0xf]
      %v1107 = vld [vmem:[%s3 + $0x9c] sm:$0xff]
      %v1108 = vld [vmem:[%s3 + $0xa4] sm:$0xf]
      %v1109 = vld [vmem:[%s3 + $0xa8] sm:$0xff]
      %v1110 = vld [vmem:[%s3 + $0xb0] sm:$0xf]
      %v1111 = vld [vmem:[%s3 + $0xb4] sm:$0xff]
      %v1112 = vld [vmem:[%s3 + $0xbc] sm:$0xf]
      %v1145 = vunpack.c.l.b16 %v1081
      %v1146 = vunpack.c.h.b16 %v1081
      %v1147 = vunpack.c.l.b16 %v1082
      %v1148 = vunpack.c.l.b16 %v1083
      %v1149 = vunpack.c.h.b16 %v1083
      %v1150 = vunpack.c.l.b16 %v1084
      %v1151 = vunpack.c.l.b16 %v1085
      %v1152 = vunpack.c.h.b16 %v1085
      %v1153 = vunpack.c.l.b16 %v1086
      %v1154 = vunpack.c.l.b16 %v1087
      %v1155 = vunpack.c.h.b16 %v1087
      %v1156 = vunpack.c.l.b16 %v1088
      %v1157 = vunpack.c.l.b16 %v1089
      %v1158 = vunpack.c.h.b16 %v1089
      %v1159 = vunpack.c.l.b16 %v1090
      %v1160 = vunpack.c.l.b16 %v1091
      %v1161 = vunpack.c.h.b16 %v1091
      %v1162 = vunpack.c.l.b16 %v1092
      %v1163 = vunpack.c.l.b16 %v1093
      %v1164 = vunpack.c.h.b16 %v1093
      %v1165 = vunpack.c.l.b16 %v1094
      %v1166 = vunpack.c.l.b16 %v1095
      %v1167 = vunpack.c.h.b16 %v1095
      %v1168 = vunpack.c.l.b16 %v1096
      %v1169 = vunpack.c.l.b16 %v1097
      %v1170 = vunpack.c.h.b16 %v1097
      %v1171 = vunpack.c.l.b16 %v1098
      %v1172 = vunpack.c.l.b16 %v1099
      %v1173 = vunpack.c.h.b16 %v1099
      %v1174 = vunpack.c.l.b16 %v1100
      %v1175 = vunpack.c.l.b16 %v1101
      %v1176 = vunpack.c.h.b16 %v1101
      %v1177 = vunpack.c.l.b16 %v1102
      %v1178 = vunpack.c.l.b16 %v1103
      %v1179 = vunpack.c.h.b16 %v1103
      %v1180 = vunpack.c.l.b16 %v1104
      %v1181 = vunpack.c.l.b16 %v1105
      %v1182 = vunpack.c.h.b16 %v1105
      %v1183 = vunpack.c.l.b16 %v1106
      %v1184 = vunpack.c.l.b16 %v1107
      %v1185 = vunpack.c.h.b16 %v1107
      %v1186 = vunpack.c.l.b16 %v1108
      %v1187 = vunpack.c.l.b16 %v1109
      %v1188 = vunpack.c.h.b16 %v1109
      %v1189 = vunpack.c.l.b16 %v1110
      %v1190 = vunpack.c.l.b16 %v1111
      %v1191 = vunpack.c.h.b16 %v1111
      %v1192 = vunpack.c.l.b16 %v1112
      %v1193 = vpack.c.b16 %v1148, %v1145
      %v1194 = vpack.c.b16 %v1149, %v1146
      %v1195 = vpack.c.b16 %v1150, %v1147
      %v1196 = vpack.c.b16 %v1154, %v1151
      %v1197 = vpack.c.b16 %v1155, %v1152
      %v1198 = vpack.c.b16 %v1156, %v1153
      %v1199 = vpack.c.b16 %v1160, %v1157
      %v1200 = vpack.c.b16 %v1161, %v1158
      %v1201 = vpack.c.b16 %v1162, %v1159
      %v1202 = vpack.c.b16 %v1166, %v1163
      %v1203 = vpack.c.b16 %v1167, %v1164
      %v1204 = vpack.c.b16 %v1168, %v1165
      %v1205 = vpack.c.b16 %v1172, %v1169
      %v1206 = vpack.c.b16 %v1173, %v1170
      %v1207 = vpack.c.b16 %v1174, %v1171
      %v1208 = vpack.c.b16 %v1178, %v1175
      %v1209 = vpack.c.b16 %v1179, %v1176
      %v1210 = vpack.c.b16 %v1180, %v1177
      %v1211 = vpack.c.b16 %v1184, %v1181
      %v1212 = vpack.c.b16 %v1185, %v1182
      %v1213 = vpack.c.b16 %v1186, %v1183
      %v1214 = vpack.c.b16 %v1190, %v1187
      %v1215 = vpack.c.b16 %v1191, %v1188
      %v1216 = vpack.c.b16 %v1192, %v1189
      %1241 = vmatprep.subr.bf16.mxu0 %v1194
      %1242 = vmatpush1.bf16.msra.mxu0 %v1193
      %1243 = vmatprep.subr.bf16.mxu0 %v1197
      %1244 = vmatpush1.bf16.msra.mxu0 %v1196
      %1245 = vmatprep.subr.bf16.mxu0 %v1200
      %1246 = vmatpush1.bf16.msra.mxu0 %v1199
      %1247 = vmatprep.subr.bf16.mxu0 %v1203
      %1248 = vmatpush1.bf16.msra.mxu0 %v1202
      %1249 = vmatprep.subr.bf16.mxu0 %v1206
      %1250 = vmatpush1.bf16.msra.mxu0 %v1205
      %1251 = vmatprep.subr.bf16.mxu0 %v1209
      %1252 = vmatpush1.bf16.msra.mxu0 %v1208
      %1253 = vmatprep.subr.bf16.mxu0 %v1212
      %1254 = vmatpush1.bf16.msra.mxu0 %v1211
      %1255 = vmatprep.subr.bf16.mxu0 %v1215
      %1256 = vmatpush1.bf16.msra.mxu0 %v1214
      %1257 = vmatprep.subr.bf16.mxu0 0
      %1258 = vmatpush1.bf16.msra.mxu0 0
      %1259 = vmatprep.subr.bf16.mxu0 0
      %1260 = vmatpush1.bf16.msra.mxu0 0
      %1261 = vmatprep.subr.bf16.mxu0 0
      %1262 = vmatpush1.bf16.msra.mxu0 0
      %1263 = vmatprep.subr.bf16.mxu0 0
      %1264 = vmatpush1.bf16.msra.mxu0 0
      %1265 = vmatprep.subr.bf16.mxu0 0
      %1266 = vmatpush1.bf16.msra.mxu0 0
      %1267 = vmatprep.subr.bf16.mxu0 0
      %1268 = vmatpush1.bf16.msra.mxu0 0
      %1269 = vmatprep.subr.bf16.mxu0 0
      %1270 = vmatpush1.bf16.msra.mxu0 0
      %1271 = vmatprep.subr.bf16.mxu0 0
      %1272 = vmatpush1.bf16.msra.mxu0 0
      %1273 = vmatprep.mubr.bf16.mxu0 0
      %1274 = vmatmul.mubr.bf16.gmra.mrb[0].mxu0 %v1073
      %v1275 = vpop.f32.mrb[0].mxu0
      %v1276 = vadd.f32 0.0, %v1275
      %v1277 = vpop.f32.mrb[0].mxu0
      %v1278 = vadd.f32 0.0, %v1277
      %v1279 = vpop.f32.mrb[0].mxu0
      %v1280 = vadd.f32 0.0, %v1279
      %v1281 = vpop.f32.mrb[0].mxu0
      %v1282 = vadd.f32 0.0, %v1281
      %1283 = vmatprep.mubr.bf16.mxu0 0
      %1284 = vmatmul.mubr.bf16.gmra.mrb[0].mxu0 %v1074
      %v1285 = vpop.f32.mrb[0].mxu0
      %v1286 = vadd.f32 0.0, %v1285
      %v1287 = vpop.f32.mrb[0].mxu0
      %v1288 = vadd.f32 0.0, %v1287
      %v1289 = vpop.f32.mrb[0].mxu0
      %v1290 = vadd.f32 0.0, %v1289
      %v1291 = vpop.f32.mrb[0].mxu0
      %v1292 = vadd.f32 0.0, %v1291
      %1293 = vmatprep.mubr.bf16.mxu0 0
      %1294 = vmatmul.mubr.bf16.gmra.mrb[0].mxu0 %v1075
      %v1295 = vpop.f32.mrb[0].mxu0
      %v1296 = vadd.f32 0.0, %v1295
      %v1297 = vpop.f32.mrb[0].mxu0
      %v1298 = vadd.f32 0.0, %v1297
      %v1299 = vpop.f32.mrb[0].mxu0
      %v1300 = vadd.f32 0.0, %v1299
      %v1301 = vpop.f32.mrb[0].mxu0
      %v1302 = vadd.f32 0.0, %v1301
      %1303 = vmatprep.mubr.bf16.mxu0 0
      %1304 = vmatmul.mubr.bf16.gmra.mrb[0].mxu0 %v1076
      %v1305 = vpop.f32.mrb[0].mxu0
      %v1306 = vadd.f32 0.0, %v1305
      %v1307 = vpop.f32.mrb[0].mxu0
      %v1308 = vadd.f32 0.0, %v1307
      %v1309 = vpop.f32.mrb[0].mxu0
      %v1310 = vadd.f32 0.0, %v1309
      %v1311 = vpop.f32.mrb[0].mxu0
      %v1312 = vadd.f32 0.0, %v1311
      %1313 = vmatprep.mubr.bf16.mxu0 0
      %1314 = vmatmul.mubr.bf16.gmra.mrb[0].mxu0 %v1077
      %v1315 = vpop.f32.mrb[0].mxu0
      %v1316 = vadd.f32 0.0, %v1315
      %v1317 = vpop.f32.mrb[0].mxu0
      %v1318 = vadd.f32 0.0, %v1317
      %v1319 = vpop.f32.mrb[0].mxu0
      %v1320 = vadd.f32 0.0, %v1319
      %v1321 = vpop.f32.mrb[0].mxu0
      %v1322 = vadd.f32 0.0, %v1321
      %1323 = vmatprep.mubr.bf16.mxu0 0
      %1324 = vmatmul.mubr.bf16.gmra.mrb[0].mxu0 %v1078
      %v1325 = vpop.f32.mrb[0].mxu0
      %v1326 = vadd.f32 0.0, %v1325
      %v1327 = vpop.f32.mrb[0].mxu0
      %v1328 = vadd.f32 0.0, %v1327
      %v1329 = vpop.f32.mrb[0].mxu0
      %v1330 = vadd.f32 0.0, %v1329
      %v1331 = vpop.f32.mrb[0].mxu0
      %v1332 = vadd.f32 0.0, %v1331
      %1333 = vmatprep.mubr.bf16.mxu0 0
      %1334 = vmatmul.mubr.bf16.gmra.mrb[0].mxu0 %v1079
      %v1335 = vpop.f32.mrb[0].mxu0
      %v1336 = vadd.f32 0.0, %v1335
      %v1337 = vpop.f32.mrb[0].mxu0
      %v1338 = vadd.f32 0.0, %v1337
      %v1339 = vpop.f32.mrb[0].mxu0
      %v1340 = vadd.f32 0.0, %v1339
      %v1341 = vpop.f32.mrb[0].mxu0
      %v1342 = vadd.f32 0.0, %v1341
      %1343 = vmatprep.mubr.bf16.mxu0 0
      %1344 = vmatmul.mubr.bf16.gmra.mrb[0].mxu0 %v1080
      %v1345 = vpop.f32.mrb[0].mxu0
      %v1346 = vadd.f32 0.0, %v1345
      %v1347 = vpop.f32.mrb[0].mxu0
      %v1348 = vadd.f32 0.0, %v1347
      %v1349 = vpop.f32.mrb[0].mxu0
      %v1350 = vadd.f32 0.0, %v1349
      %v1351 = vpop.f32.mrb[0].mxu0
      %v1352 = vadd.f32 0.0, %v1351
      %1353 = vdwg.mxu0
      %1354 = vmatprep.subr.bf16.mxu0 0
      %1355 = vmatpush1.bf16.msra.mxu0 %v1195
      %1356 = vmatprep.subr.bf16.mxu0 0
      %1357 = vmatpush1.bf16.msra.mxu0 %v1198
      %1358 = vmatprep.subr.bf16.mxu0 0
      %1359 = vmatpush1.bf16.msra.mxu0 %v1201
      %1360 = vmatprep.subr.bf16.mxu0 0
      %1361 = vmatpush1.bf16.msra.mxu0 %v1204
      %1362 = vmatprep.subr.bf16.mxu0 0
      %1363 = vmatpush1.bf16.msra.mxu0 %v1207
      %1364 = vmatprep.subr.bf16.mxu0 0
      %1365 = vmatpush1.bf16.msra.mxu0 %v1210
      %1366 = vmatprep.subr.bf16.mxu0 0
      %1367 = vmatpush1.bf16.msra.mxu0 %v1213
      %1368 = vmatprep.subr.bf16.mxu0 0
      %1369 = vmatpush1.bf16.msra.mxu0 %v1216
      %1370 = vmatprep.subr.bf16.mxu0 0
      %1371 = vmatpush1.bf16.msra.mxu0 0
      %1372 = vmatprep.subr.bf16.mxu0 0
      %1373 = vmatpush1.bf16.msra.mxu0 0
      %1374 = vmatprep.subr.bf16.mxu0 0
      %1375 = vmatpush1.bf16.msra.mxu0 0
      %1376 = vmatprep.subr.bf16.mxu0 0
      %1377 = vmatpush1.bf16.msra.mxu0 0
      %1378 = vmatprep.subr.bf16.mxu0 0
      %1379 = vmatpush1.bf16.msra.mxu0 0
      %1380 = vmatprep.subr.bf16.mxu0 0
      %1381 = vmatpush1.bf16.msra.mxu0 0
      %1382 = vmatprep.subr.bf16.mxu0 0
      %1383 = vmatpush1.bf16.msra.mxu0 0
      %1384 = vmatprep.subr.bf16.mxu0 0
      %1385 = vmatpush1.bf16.msra.mxu0 0
      %1386 = vmatprep.mubr.bf16.mxu0 0
      %1387 = vmatmul.mubr.bf16.gmra.mrb[0].mxu0 %v1073
      %v1388 = vpop.f32.mrb[0].mxu0
      %v1389 = vadd.f32 0.0, %v1388
      %v1390 = vpop.f32.mrb[0].mxu0
      %v1391 = vpop.f32.mrb[0].mxu0
      %v1392 = vadd.f32 0.0, %v1391
      %v1393 = vpop.f32.mrb[0].mxu0
      %1394 = vmatprep.mubr.bf16.mxu0 0
      %1395 = vmatmul.mubr.bf16.gmra.mrb[0].mxu0 %v1074
      %v1396 = vpop.f32.mrb[0].mxu0
      %v1397 = vadd.f32 0.0, %v1396
      %v1398 = vpop.f32.mrb[0].mxu0
      %v1399 = vpop.f32.mrb[0].mxu0
      %v1400 = vadd.f32 0.0, %v1399
      %v1401 = vpop.f32.mrb[0].mxu0
      %1402 = vmatprep.mubr.bf16.mxu0 0
      %1403 = vmatmul.mubr.bf16.gmra.mrb[0].mxu0 %v1075
      %v1404 = vpop.f32.mrb[0].mxu0
      %v1405 = vadd.f32 0.0, %v1404
      %v1406 = vpop.f32.mrb[0].mxu0
      %v1407 = vpop.f32.mrb[0].mxu0
      %v1408 = vadd.f32 0.0, %v1407
      %v1409 = vpop.f32.mrb[0].mxu0
      %1410 = vmatprep.mubr.bf16.mxu0 0
      %1411 = vmatmul.mubr.bf16.gmra.mrb[0].mxu0 %v1076
      %v1412 = vpop.f32.mrb[0].mxu0
      %v1413 = vadd.f32 0.0, %v1412
      %v1414 = vpop.f32.mrb[0].mxu0
      %v1415 = vpop.f32.mrb[0].mxu0
      %v1416 = vadd.f32 0.0, %v1415
      %v1417 = vpop.f32.mrb[0].mxu0
      %1418 = vmatprep.mubr.bf16.mxu0 0
      %1419 = vmatmul.mubr.bf16.gmra.mrb[0].mxu0 %v1077
      %v1420 = vpop.f32.mrb[0].mxu0
      %v1421 = vadd.f32 0.0, %v1420
      %v1422 = vpop.f32.mrb[0].mxu0
      %v1423 = vpop.f32.mrb[0].mxu0
      %v1424 = vadd.f32 0.0, %v1423
      %v1425 = vpop.f32.mrb[0].mxu0
      %1426 = vmatprep.mubr.bf16.mxu0 0
      %1427 = vmatmul.mubr.bf16.gmra.mrb[0].mxu0 %v1078
      %v1428 = vpop.f32.mrb[0].mxu0
      %v1429 = vadd.f32 0.0, %v1428
      %v1430 = vpop.f32.mrb[0].mxu0
      %v1431 = vpop.f32.mrb[0].mxu0
      %v1432 = vadd.f32 0.0, %v1431
      %v1433 = vpop.f32.mrb[0].mxu0
      %1434 = vmatprep.mubr.bf16.mxu0 0
      %1435 = vmatmul.mubr.bf16.gmra.mrb[0].mxu0 %v1079
      %v1436 = vpop.f32.mrb[0].mxu0
      %v1437 = vadd.f32 0.0, %v1436
      %v1438 = vpop.f32.mrb[0].mxu0
      %v1439 = vpop.f32.mrb[0].mxu0
      %v1440 = vadd.f32 0.0, %v1439
      %v1441 = vpop.f32.mrb[0].mxu0
      %1442 = vmatprep.mubr.bf16.mxu0 0
      %1443 = vmatmul.mubr.bf16.gmra.mrb[0].mxu0 %v1080
      %v1444 = vpop.f32.mrb[0].mxu0
      %v1445 = vadd.f32 0.0, %v1444
      %v1446 = vpop.f32.mrb[0].mxu0
      %v1447 = vpop.f32.mrb[0].mxu0
      %v1448 = vadd.f32 0.0, %v1447
      %v1449 = vpop.f32.mrb[0].mxu0
      %1450 = vdwg.mxu0
      %v1451 = vrot.slane %v1276, 7
      %v1452 = vrot.slane %v1280, 7
      %v1453 = vrot.slane %v1286, 7
      %v1454 = vrot.slane %v1290, 7
      %v1455 = vrot.slane %v1296, 7
      %v1456 = vrot.slane %v1300, 7
      %v1457 = vrot.slane %v1306, 7
      %v1458 = vrot.slane %v1310, 7
      %v1459 = vrot.slane %v1316, 7
      %v1460 = vrot.slane %v1320, 7
      %v1461 = vrot.slane %v1326, 7
      %v1462 = vrot.slane %v1330, 7
      %v1463 = vrot.slane %v1336, 7
      %v1464 = vrot.slane %v1340, 7
      %v1465 = vrot.slane %v1346, 7
      %v1466 = vrot.slane %v1350, 7
      %v1467 = vsel %vm920, %v1465, %v1466
      %v1468 = vsel %vm920, %v1464, %v1465
      %v1469 = vsel %vm920, %v1463, %v1464
      %v1470 = vsel %vm920, %v1462, %v1463
      %v1471 = vsel %vm920, %v1461, %v1462
      %v1472 = vsel %vm920, %v1460, %v1461
      %v1473 = vsel %vm920, %v1459, %v1460
      %v1474 = vsel %vm920, %v1458, %v1459
      %v1475 = vsel %vm920, %v1457, %v1458
      %v1476 = vsel %vm920, %v1456, %v1457
      %v1477 = vsel %vm920, %v1455, %v1456
      %v1478 = vsel %vm920, %v1454, %v1455
      %v1479 = vsel %vm920, %v1453, %v1454
      %v1480 = vsel %vm920, %v1452, %v1453
      %v1481 = vsel %vm920, %v1451, %v1452
      %v1482 = vsel %vm920, %v1466, %v1451
      %v1483 = vsel %vm438, %v1482, 0.0
      %v1484 = vsel %vm439, %v1481, 0.0
      %v1485 = vsel %vm440, %v1480, 0.0
      %v1486 = vsel %vm441, %v1479, 0.0
      %v1487 = vsel %vm442, %v1478, 0.0
      %v1488 = vsel %vm443, %v1477, 0.0
      %v1489 = vsel %vm444, %v1476, 0.0
      %v1490 = vsel %vm445, %v1475, 0.0
      %v1491 = vsel %vm446, %v1474, 0.0
      %v1492 = vsel %vm447, %v1473, 0.0
      %v1493 = vsel %vm448, %v1472, 0.0
      %v1494 = vsel %vm449, %v1471, 0.0
      %v1495 = vsel %vm450, %v1470, 0.0
      %v1496 = vsel %vm451, %v1469, 0.0
      %v1497 = vsel %vm452, %v1468, 0.0
      %v1498 = vsel %vm453, %v1467, 0.0
      %v1499 = vrot.slane %v1389, 1
      %v1500 = vrot.slane %v1392, 1
      %v1501 = vrot.slane %v1397, 1
      %v1502 = vrot.slane %v1400, 1
      %v1503 = vrot.slane %v1405, 1
      %v1504 = vrot.slane %v1408, 1
      %v1505 = vrot.slane %v1413, 1
      %v1506 = vrot.slane %v1416, 1
      %v1507 = vrot.slane %v1421, 1
      %v1508 = vrot.slane %v1424, 1
      %v1509 = vrot.slane %v1429, 1
      %v1510 = vrot.slane %v1432, 1
      %v1511 = vrot.slane %v1437, 1
      %v1512 = vrot.slane %v1440, 1
      %v1513 = vrot.slane %v1445, 1
      %v1514 = vrot.slane %v1448, 1
      %v1515 = vsel %vm969, %v1513, %v1514
      %v1516 = vsel %vm969, %v1512, %v1513
      %v1517 = vsel %vm969, %v1511, %v1512
      %v1518 = vsel %vm969, %v1510, %v1511
      %v1519 = vsel %vm969, %v1509, %v1510
      %v1520 = vsel %vm969, %v1508, %v1509
      %v1521 = vsel %vm969, %v1507, %v1508
      %v1522 = vsel %vm969, %v1506, %v1507
      %v1523 = vsel %vm969, %v1505, %v1506
      %v1524 = vsel %vm969, %v1504, %v1505
      %v1525 = vsel %vm969, %v1503, %v1504
      %v1526 = vsel %vm969, %v1502, %v1503
      %v1527 = vsel %vm969, %v1501, %v1502
      %v1528 = vsel %vm969, %v1500, %v1501
      %v1529 = vsel %vm969, %v1499, %v1500
      %v1530 = vsel %vm969, %v1514, %v1499
      %v1531 = vsel %vm454, %v1529, 0.0
      %v1532 = vsel %vm455, %v1528, 0.0
      %v1533 = vsel %vm456, %v1527, 0.0
      %v1534 = vsel %vm457, %v1526, 0.0
      %v1535 = vsel %vm458, %v1525, 0.0
      %v1536 = vsel %vm459, %v1524, 0.0
      %v1537 = vsel %vm460, %v1523, 0.0
      %v1538 = vsel %vm461, %v1522, 0.0
      %v1539 = vsel %vm462, %v1521, 0.0
      %v1540 = vsel %vm463, %v1520, 0.0
      %v1541 = vsel %vm464, %v1519, 0.0
      %v1542 = vsel %vm465, %v1518, 0.0
      %v1543 = vsel %vm466, %v1517, 0.0
      %v1544 = vsel %vm467, %v1516, 0.0
      %v1545 = vsel %vm468, %v1515, 0.0
      %v1546 = vsel %vm469, %v1530, 0.0
      %v1547 = vadd.f32 %v1278, %v1483
      %v1548 = vadd.f32 %v1282, %v1484
      %v1549 = vadd.f32 %v1288, %v1485
      %v1550 = vadd.f32 %v1292, %v1486
      %v1551 = vadd.f32 %v1298, %v1487
      %v1552 = vadd.f32 %v1302, %v1488
      %v1553 = vadd.f32 %v1308, %v1489
      %v1554 = vadd.f32 %v1312, %v1490
      %v1555 = vadd.f32 %v1318, %v1491
      %v1556 = vadd.f32 %v1322, %v1492
      %v1557 = vadd.f32 %v1328, %v1493
      %v1558 = vadd.f32 %v1332, %v1494
      %v1559 = vadd.f32 %v1338, %v1495
      %v1560 = vadd.f32 %v1342, %v1496
      %v1561 = vadd.f32 %v1348, %v1497
      %v1562 = vadd.f32 %v1352, %v1498
      %v1563 = vadd.f32 %v1547, %v1531
      %v1564 = vadd.f32 %v1548, %v1532
      %v1565 = vadd.f32 %v1549, %v1533
      %v1566 = vadd.f32 %v1550, %v1534
      %v1567 = vadd.f32 %v1551, %v1535
      %v1568 = vadd.f32 %v1552, %v1536
      %v1569 = vadd.f32 %v1553, %v1537
      %v1570 = vadd.f32 %v1554, %v1538
      %v1571 = vadd.f32 %v1555, %v1539
      %v1572 = vadd.f32 %v1556, %v1540
      %v1573 = vadd.f32 %v1557, %v1541
      %v1574 = vadd.f32 %v1558, %v1542
      %v1575 = vadd.f32 %v1559, %v1543
      %v1576 = vadd.f32 %v1560, %v1544
      %v1577 = vadd.f32 %v1561, %v1545
      %v1578 = vadd.f32 %v1562, %v1546
      %v1579 = vld [vmem:[%s4] sm:$0x1]
      %v1581 = vlaneseq
      %v1582 = vshrl.u32 %v1581, 7
      %v1583 = vsub.s32 0, %v1582
      %v1584 = vrot.slane %v1579, %v1583
      %v1586 = vadd.f32 %v1563, %v1584
      %v1587 = vadd.f32 %v1564, %v1584
      %v1588 = vadd.f32 %v1565, %v1584
      %v1589 = vadd.f32 %v1566, %v1584
      %v1590 = vadd.f32 %v1567, %v1584
      %v1591 = vadd.f32 %v1568, %v1584
      %v1592 = vadd.f32 %v1569, %v1584
      %v1593 = vadd.f32 %v1570, %v1584
      %v1594 = vadd.f32 %v1571, %v1584
      %v1595 = vadd.f32 %v1572, %v1584
      %v1596 = vadd.f32 %v1573, %v1584
      %v1597 = vadd.f32 %v1574, %v1584
      %v1598 = vadd.f32 %v1575, %v1584
      %v1599 = vadd.f32 %v1576, %v1584
      %v1600 = vadd.f32 %v1577, %v1584
      %v1601 = vadd.f32 %v1578, %v1584
      %v1602 = vunpack.c.l.bf16 %v470
      %v1603 = vunpack.c.l.bf16 %v471
      %v1604 = vunpack.c.l.bf16 %v472
      %v1605 = vunpack.c.l.bf16 %v473
      %v1606 = vunpack.c.l.bf16 %v474
      %v1607 = vunpack.c.l.bf16 %v475
      %v1608 = vunpack.c.l.bf16 %v476
      %v1609 = vunpack.c.l.bf16 %v477
      %v1610 = vunpack.c.l.bf16 %v478
      %v1611 = vunpack.c.l.bf16 %v479
      %v1612 = vunpack.c.l.bf16 %v480
      %v1613 = vunpack.c.l.bf16 %v481
      %v1614 = vunpack.c.l.bf16 %v482
      %v1615 = vunpack.c.l.bf16 %v483
      %v1616 = vunpack.c.l.bf16 %v484
      %v1617 = vunpack.c.l.bf16 %v485
      %v1618 = vadd.f32 %v1586, %v1602
      %v1619 = vadd.f32 %v1587, %v1603
      %v1620 = vadd.f32 %v1588, %v1604
      %v1621 = vadd.f32 %v1589, %v1605
      %v1622 = vadd.f32 %v1590, %v1606
      %v1623 = vadd.f32 %v1591, %v1607
      %v1624 = vadd.f32 %v1592, %v1608
      %v1625 = vadd.f32 %v1593, %v1609
      %v1626 = vadd.f32 %v1594, %v1610
      %v1627 = vadd.f32 %v1595, %v1611
      %v1628 = vadd.f32 %v1596, %v1612
      %v1629 = vadd.f32 %v1597, %v1613
      %v1630 = vadd.f32 %v1598, %v1614
      %v1631 = vadd.f32 %v1599, %v1615
      %v1632 = vadd.f32 %v1600, %v1616
      %v1633 = vadd.f32 %v1601, %v1617
      %v1634 = vmax.f32 %v1618, 0.0
      %v1635 = vmax.f32 %v1619, 0.0
      %v1636 = vmax.f32 %v1620, 0.0
      %v1637 = vmax.f32 %v1621, 0.0
      %v1638 = vmax.f32 %v1622, 0.0
      %v1639 = vmax.f32 %v1623, 0.0
      %v1640 = vmax.f32 %v1624, 0.0
      %v1641 = vmax.f32 %v1625, 0.0
      %v1642 = vmax.f32 %v1626, 0.0
      %v1643 = vmax.f32 %v1627, 0.0
      %v1644 = vmax.f32 %v1628, 0.0
      %v1645 = vmax.f32 %v1629, 0.0
      %v1646 = vmax.f32 %v1630, 0.0
      %v1647 = vmax.f32 %v1631, 0.0
      %v1648 = vmax.f32 %v1632, 0.0
      %v1649 = vmax.f32 %v1633, 0.0
      %1650 = vst [vmem:[%s226] sm:$0xff] %v1634
      %1651 = vst [vmem:[%s226 + $0x8] sm:$0xff] %v1635
      %1652 = vst [vmem:[%s226 + $0x10] sm:$0xff] %v1636
      %1653 = vst [vmem:[%s226 + $0x18] sm:$0xff] %v1637
      %1654 = vst [vmem:[%s226 + $0x20] sm:$0xff] %v1638
      %1655 = vst [vmem:[%s226 + $0x28] sm:$0xff] %v1639
      %1656 = vst [vmem:[%s226 + $0x30] sm:$0xff] %v1640
      %1657 = vst [vmem:[%s226 + $0x38] sm:$0xff] %v1641
      %1658 = vst [vmem:[%s226 + $0x40] sm:$0xff] %v1642
      %1659 = vst [vmem:[%s226 + $0x48] sm:$0xff] %v1643
      %1660 = vst [vmem:[%s226 + $0x50] sm:$0xff] %v1644
      %1661 = vst [vmem:[%s226 + $0x58] sm:$0xff] %v1645
      %1662 = vst [vmem:[%s226 + $0x60] sm:$0xff] %v1646
      %1663 = vst [vmem:[%s226 + $0x68] sm:$0xff] %v1647
      %1664 = vst [vmem:[%s226 + $0x70] sm:$0xff] %v1648
      %1665 = vst [vmem:[%s226 + $0x78] sm:$0xff] %v1649
      %s1666 = smul.u32 16, %s16
      %p1667 = scmp.lt.s32.totalorder %s1666, 31
      %s1668 = scalar_select %p1667, %s1666, 31
      %s1669 = smul.addr %s1668, 8
      %s1670 = scalar_lea.vmem %s5, %s1669
      // Predicated region
      $region41: #{basic_block_apply.1} parent=39 // pred_check
        %p1671 = pneg %p144
      $region42: #{basic_block_apply.1} parent=39 // pred_check_branch
        %1673 = sbr.rel (%p1671) target = $region44
      $region43: #{basic_block_apply.1} parent=39 // pred_region
        %s1674 = smul.u32 16, %s16
      $region44: #{basic_block_apply.1} parent=39 // pred_fallthru
        _
    $region40: #{basic_block_apply.1} parent=5 // pred_fallthru
      _
    %p1675 = scmp.le.s32.totalorder 2, %s11
    // Predicated region
    $region45: #{basic_block_apply.1} parent=5 // pred_check
      %p1676 = pneg %p1675
    $region46: #{basic_block_apply.1} parent=5 // pred_check_branch
      %1678 = sbr.rel (%p1676) target = $region48
    $region47: #{basic_block_apply.1} parent=5 // pred_region
      %s1679 = ssub.s32 %s11, 2
      // Predicated region
      $region49: #{basic_block_apply.1} parent=47 // pred_check
        %p1680 = pneg %p150
      $region50: #{basic_block_apply.1} parent=47 // pred_check_branch
        %1682 = sbr.rel (%p1680) target = $region52
      $region51: #{basic_block_apply.1} parent=47 // pred_region
        %s1683 = smul.u32 16, %s17
        %p1684 = scmp.lt.s32.totalorder %s1683, 31
        %s1685 = scalar_select %p1684, %s1683, 31
        %s1686 = smul.addr %s1685, 8
        %s1687 = scalar_lea.vmem %s5, %s1686
      $region52: #{basic_block_apply.1} parent=47 // pred_fallthru
        _
    $region48: #{basic_block_apply.1} parent=5 // pred_fallthru
      _
  $region6: #{basic_block_apply.1} parent=0 // loop_footer
    %s15 = sadd.s32 1, %s11
  $region7: #{basic_block_apply.1} parent=0 // loop_footer_branch
    %10 = sbr.rel target = $region3
  $region8: #{basic_block_apply.1} parent=0 // loop_exit
    _

</llo_original>
